<compile_context>
chip_gen: v6e
topology: v6e:2x2x1
jax: 0.10.0
libtpu: 0.0.40
codegen_flags: <defaults>
</compile_context>

<pallas_src>
import numpy as np

import jax
import jax.numpy as jnp
from jax.experimental import pallas as pl
from jax.experimental.pallas import tpu as pltpu

# ---------------------------------------------------------------------------
# Static network dimensions (Linear(256, 10) pins the 28x28, Cin=1 input).
# ---------------------------------------------------------------------------
C1, C2 = 32, 64               # conv channel counts
K_, S_ = 5, 3                 # kernel size / stride (both convs)
H_IN = 28                     # input spatial size
H1 = (H_IN - K_) // S_ + 1    # 8  : conv1 output spatial
H2 = (H1 - K_) // S_ + 1      # 2  : conv2 output spatial
N_CLASSES = 10
N_PAD = 128                   # lane width; == H2 * C2, so conv2 lanes are dense
K1_PAD = 32                   # conv1 image width padded 28 -> 32
K1F = K_ * K1_PAD             # 160: folded conv1 contraction (kh, w)
H1C1 = H1 * C1                # 256: conv1 activation row width

assert N_PAD == H2 * C2


def _round_up(n, m):
    return ((n + m - 1) // m) * m


# ---------------------------------------------------------------------------
# Fused Pallas kernel: conv1+ReLU -> conv2+ReLU -> flatten -> Linear
# ---------------------------------------------------------------------------
def _convnet_kernel(xg_ref, w1_ref, b1_ref, w2_ref, b2_ref, wo_ref, bo_ref,
                    o_ref):
    """One batch tile per grid step; all contractions go through the MXU.

    xg_ref : (H1*tb, K1F)        xg[ho1*tb + b, kh*32 + w] = x[b, 3*ho1+kh, w]
    w1_ref : (K1F, H1*C1)        conv1 weight with (kh, kw)-gather folded in
    b1_ref : (1, H1*C1)
    w2_ref : (K_, H1*C1, 128)    conv2 weight, both wo2 packed into lanes
    b2_ref : (1, 128)            conv2 bias tiled over the two wo2 groups
    wo_ref : (H2*128, 128)       Linear weight, flatten permutation folded in
    bo_ref : (1, 128)
    o_ref  : (tb, 128)           padded logits (real ones in [:, :10])
    """
    tb = o_ref.shape[0]

    # ---- conv1 + ReLU: ONE GEMM, K = 160 ------------------------------------
    h1 = jnp.maximum(
        jnp.dot(xg_ref[...], w1_ref[...], preferred_element_type=jnp.float32)
        + b1_ref[...],
        0.0)                                           # (H1*tb, 256) in vregs

    # ---- conv2 + ReLU (both wo2 packed into the 128 lanes) ------------------
    b2 = b2_ref[...]                                   # hoisted (1, 128)
    parts = []
    for ho2 in range(H2):
        acc = None
        for kh in range(K_):
            ho1 = S_ * ho2 + kh
            a = h1[ho1 * tb:(ho1 + 1) * tb, :]         # static, 8-aligned slice
            d = jnp.dot(a, w2_ref[kh], preferred_element_type=jnp.float32)
            acc = d if acc is None else acc + d
        parts.append(jnp.maximum(acc + b2, 0.0))       # (tb, 128)

    # ---- flatten + Linear: ONE dense (tb,256)x(256,128) GEMM ----------------
    h2 = jnp.concatenate(parts, axis=-1)               # (tb, 256)
    o_ref[...] = (jnp.dot(h2, wo_ref[...], preferred_element_type=jnp.float32)
                  + bo_ref[...])


# ---------------------------------------------------------------------------
# Forward wrapper (jit-able).  Only glue: the stride-3 row gather / tile
# re-layout of the (tiny) input image that feeds the fused kernel.
# ---------------------------------------------------------------------------
def convnet_forward(x_nchw, kparams, tb=None):
    """x_nchw: (B, 1, 28, 28) f32 -> logits (B, 10) f32."""
    B = x_nchw.shape[0]
    if tb is None:
        # Batch tile: multiple of 8 (sublane-aligned h1 slices), small enough
        # that h1 (H1*tb x 256 f32) stays in registers.  Larger batches simply
        # stream more grid steps (double-buffered xg/out DMA) instead of
        # growing the VMEM footprint.
        tb = min(_round_up(B, 8), 16)
    assert tb % 8 == 0
    b_pad = _round_up(B, tb)          # pad batch; extra rows are discarded
    n_tiles = b_pad // tb

    x = x_nchw[:, 0, :, :].astype(jnp.float32)                     # (B, 28, 28)
    x = jnp.pad(x, ((0, b_pad - B), (0, 0), (0, K1_PAD - H_IN)))   # (b_pad,28,32)

    # xg[t, ho1*tb + b, kh*32 + w] = x[t*tb + b, 3*ho1 + kh, w]
    row_idx = (S_ * np.arange(H1)[:, None] + np.arange(K_)[None, :]).reshape(-1)
    xg = jnp.take(x, jnp.asarray(row_idx), axis=1)                 # (b_pad,40,32)
    xg = xg.reshape(b_pad, H1, K1F)
    xg = xg.reshape(n_tiles, tb, H1, K1F).transpose(0, 2, 1, 3)
    xg = xg.reshape(n_tiles, H1 * tb, K1F)

    out = pl.pallas_call(
        _convnet_kernel,
        out_shape=jax.ShapeDtypeStruct((b_pad, N_PAD), jnp.float32),
        grid=(n_tiles,),
        in_specs=[
            # activations: tiled over the batch grid
            pl.BlockSpec((None, H1 * tb, K1F), lambda i: (i, 0, 0)),
            # weights / biases: grid-invariant, DMA'd once, VMEM-resident
            pl.BlockSpec((K1F, H1C1), lambda i: (0, 0)),
            pl.BlockSpec((1, H1C1), lambda i: (0, 0)),
            pl.BlockSpec((K_, H1C1, N_PAD), lambda i: (0, 0, 0)),
            pl.BlockSpec((1, N_PAD), lambda i: (0, 0)),
            pl.BlockSpec((H2 * N_PAD, N_PAD), lambda i: (0, 0)),
            pl.BlockSpec((1, N_PAD), lambda i: (0, 0)),
        ],
        out_specs=pl.BlockSpec((tb, N_PAD), lambda i: (i, 0)),
        compiler_params=pltpu.CompilerParams(
            dimension_semantics=("parallel",),       # shard tiles on v7x's 2 TCs
            vmem_limit_bytes=32 * 1024 * 1024),      # safe on v5e/v6e/v7x
    )(xg, kparams["w1m"], kparams["b1m"], kparams["w2p"], kparams["b2p"],
      kparams["wom"], kparams["bom"])
    return out[:B, :N_CLASSES]


# ---------------------------------------------------------------------------
# Parameters: PyTorch-layout init + one-time re-layout for the fused kernel.
# ---------------------------------------------------------------------------
def init_params(key):
    k1, k2, k3, k4, k5, k6 = jax.random.split(key, 6)
    return {
        "w1": 0.1 * jax.random.normal(k1, (C1, 1, K_, K_), jnp.float32),
        "b1": 0.1 * jax.random.normal(k2, (C1,), jnp.float32),
        "w2": 0.05 * jax.random.normal(k3, (C2, C1, K_, K_), jnp.float32),
        "b2": 0.05 * jax.random.normal(k4, (C2,), jnp.float32),
        "w_out": 0.05 * jax.random.normal(k5, (N_CLASSES, C2 * H2 * H2),
                                          jnp.float32),
        "b_out": 0.05 * jax.random.normal(k6, (N_CLASSES,), jnp.float32),
    }


def prepare_kernel_params(params):
    """One-time re-layout of PyTorch-layout weights into kernel layouts.

    Pure re-expression of the same linear ops: spatial gathers, wo2 packing
    and the NCHW-flatten permutation are folded into the weights.  Only the
    conv1 image-width pad (28->32) and the Linear output pad (10->128) are
    zero padding; conv2's 128 lanes are fully dense (2 * 64)."""
    w1 = np.asarray(params["w1"], np.float32)      # (C1, 1, K, K)
    b1 = np.asarray(params["b1"], np.float32)
    w2 = np.asarray(params["w2"], np.float32)      # (C2, C1, K, K)
    b2 = np.asarray(params["b2"], np.float32)
    wo = np.asarray(params["w_out"], np.float32)   # (10, 256)
    bo = np.asarray(params["b_out"], np.float32)

    # conv1: fold kh and the stride-3 column gather into one (160, 256) weight:
    #   w1m[kh*32 + w, wo1*C1 + c1] = w1[c1, 0, kh, w - 3*wo1]   (0 elsewhere)
    w1m = np.zeros((K1F, H1C1), np.float32)
    for kh in range(K_):
        for wo1 in range(H1):
            for kw in range(K_):
                w1m[kh * K1_PAD + S_ * wo1 + kw,
                    wo1 * C1:(wo1 + 1) * C1] = w1[:, 0, kh, kw]
    b1m = np.tile(b1, H1)[None, :]                              # (1, 256)

    # conv2: per-kh slab over the full conv1 row, both wo2 packed into lanes:
    #   w2p[kh, (3*wo2+kw)*C1 + c1, wo2*C2 + c2] = w2[c2, c1, kh, kw]
    w2p = np.zeros((K_, H1C1, N_PAD), np.float32)
    for kh in range(K_):
        for wo2 in range(H2):
            for kw in range(K_):
                col0 = (S_ * wo2 + kw) * C1
                w2p[kh, col0:col0 + C1,
                    wo2 * C2:(wo2 + 1) * C2] = w2[:, :, kh, kw].T
    b2p = np.zeros((1, N_PAD), np.float32)
    for wo2 in range(H2):
        b2p[0, wo2 * C2:(wo2 + 1) * C2] = b2

    # Linear: dense (256, 128) weight matching the kernel's lane-concatenated
    # h2 layout col = ho2*128 + wo2*64 + c2; PyTorch flatten = c2*4 + ho2*2 + wo2.
    wom = np.zeros((H2 * N_PAD, N_PAD), np.float32)
    for ho2 in range(H2):
        for wo2 in range(H2):
            for c2 in range(C2):
                src = c2 * (H2 * H2) + ho2 * H2 + wo2
                wom[ho2 * N_PAD + wo2 * C2 + c2, :N_CLASSES] = wo[:, src]
    bom = np.zeros((1, N_PAD), np.float32)
    bom[0, :N_CLASSES] = bo

    arrays = {"w1m": w1m, "b1m": b1m, "w2p": w2p, "b2p": b2p,
              "wom": wom, "bom": bom}
    return {k: jnp.asarray(v) for k, v in arrays.items()}


# ---------------------------------------------------------------------------
# Plain-JAX reference (PyTorch semantics) for a correctness check.
# ---------------------------------------------------------------------------
def _reference_forward(x_nchw, params):
    hp = jax.lax.Precision.HIGHEST

    def conv2d(x, w, b, stride):
        Bn, Cin, H, W = x.shape
        Cout, _, KH, KW = w.shape
        Ho = (H - KH) // stride + 1
        Wo = (W - KW) // stride + 1
        cols = []
        for kh in range(KH):
            for kw in range(KW):
                cols.append(x[:, :, kh:kh + stride * (Ho - 1) + 1:stride,
                                    kw:kw + stride * (Wo - 1) + 1:stride])
        patches = jnp.stack(cols, axis=2).reshape(Bn, Cin * KH * KW, Ho, Wo)
        wmat = w.reshape(Cout, Cin * KH * KW)
        return (jnp.einsum("ok,bkhw->bohw", wmat, patches, precision=hp)
                + b[None, :, None, None])

    x = x_nchw.astype(jnp.float32)
    h = jnp.maximum(conv2d(x, params["w1"], params["b1"], S_), 0.0)
    h = jnp.maximum(conv2d(h, params["w2"], params["b2"], S_), 0.0)
    h = h.reshape(h.shape[0], -1)                       # NCHW flatten (c, h, w)
    return jnp.matmul(h, params["w_out"].T, precision=hp) + params["b_out"]


# ---------------------------------------------------------------------------
if __name__ == "__main__":
    key = jax.random.PRNGKey(0)
    kx, kp = jax.random.split(key)
    # Linear(256, 10) forces the post-conv spatial size to 2x2 -> 28x28 input,
    # batch = 2, channels = 1 (MNIST-like).
    x = jax.random.normal(kx, (2, 1, H_IN, H_IN), jnp.float32)
    params = init_params(kp)
    kparams = prepare_kernel_params(params)        # one-time weight re-layout

    out = jax.block_until_ready(jax.jit(convnet_forward)(x, kparams))
    assert out.shape == (2, N_CLASSES) and out.dtype == jnp.float32

    ref = jax.block_until_ready(jax.jit(_reference_forward)(x, params))
    max_diff = float(jnp.max(jnp.abs(out - ref)))
    # All arrays are f32; the residual slack covers the MXU's default-precision
    # handling of f32 operands.  Revisit explicitly if operands move to bf16.
    assert max_diff < 5e-3, "max |diff| = %g" % max_diff

    print("KERNEL_OK")
</pallas_src>

<mosaic_0001>
module attributes {stable_mosaic.version = 11 : i64} {
  func.func @_convnet_kernel(%arg0: i32, %arg1: memref<1x64x160xf32, #tpu.memory_space<vmem>>, %arg2: memref<160x256xf32, #tpu.memory_space<vmem>>, %arg3: memref<1x256xf32, #tpu.memory_space<vmem>>, %arg4: memref<5x256x128xf32, #tpu.memory_space<vmem>>, %arg5: memref<1x128xf32, #tpu.memory_space<vmem>>, %arg6: memref<256x128xf32, #tpu.memory_space<vmem>>, %arg7: memref<1x128xf32, #tpu.memory_space<vmem>>, %arg8: memref<8x128xf32, #tpu.memory_space<vmem>>) attributes {dimension_semantics = [#tpu.dimension_semantics<parallel>], iteration_bounds = array<i64: 1>, scalar_prefetch = 0 : i64, scratch_operands = 0 : i64, tpu.core_type = #tpu.core_type<tc>, window_params = [{transform_indices = @transform_0, window_bounds = array<i64: 1, 64, 160>}, {pipeline_mode = #tpu.pipeline_mode<synchronous>, transform_indices = @transform_1, window_bounds = array<i64: 160, 256>}, {pipeline_mode = #tpu.pipeline_mode<synchronous>, transform_indices = @transform_2, window_bounds = array<i64: 1, 256>}, {pipeline_mode = #tpu.pipeline_mode<synchronous>, transform_indices = @transform_3, window_bounds = array<i64: 5, 256, 128>}, {pipeline_mode = #tpu.pipeline_mode<synchronous>, transform_indices = @transform_4, window_bounds = array<i64: 1, 128>}, {pipeline_mode = #tpu.pipeline_mode<synchronous>, transform_indices = @transform_5, window_bounds = array<i64: 256, 128>}, {pipeline_mode = #tpu.pipeline_mode<synchronous>, transform_indices = @transform_6, window_bounds = array<i64: 1, 128>}, {transform_indices = @transform_7, window_bounds = array<i64: 8, 128>}]} {
    %c0 = arith.constant 0 : index
    %c0_0 = arith.constant 0 : index
    %c0_1 = arith.constant 0 : index
    %0 = vector.load %arg1[%c0, %c0_0, %c0_1] : memref<1x64x160xf32, #tpu.memory_space<vmem>>, vector<1x64x160xf32>
    %1 = vector.shape_cast %0 : vector<1x64x160xf32> to vector<64x160xf32>
    %c0_2 = arith.constant 0 : index
    %c0_3 = arith.constant 0 : index
    %2 = vector.load %arg2[%c0_2, %c0_3] : memref<160x256xf32, #tpu.memory_space<vmem>>, vector<160x256xf32>
    %cst = arith.constant dense<0.000000e+00> : vector<64x256xf32>
    %3 = tpu.matmul %1, %2, %cst {dimension_numbers = #tpu.dot_dimension_numbers<[1], [0], [0], [1], [0, 0, 1, 1], [], []>} : vector<64x160xf32>, vector<160x256xf32>, vector<64x256xf32> -> vector<64x256xf32>
    %c0_4 = arith.constant 0 : index
    %c0_5 = arith.constant 0 : index
    %4 = vector.load %arg3[%c0_4, %c0_5] : memref<1x256xf32, #tpu.memory_space<vmem>>, vector<1x256xf32>
    %5 = vector.broadcast %4 : vector<1x256xf32> to vector<64x256xf32>
    %6 = arith.addf %3, %5 : vector<64x256xf32>
    %cst_6 = arith.constant 0.000000e+00 : f32
    %7 = vector.broadcast %cst_6 : f32 to vector<64x256xf32>
    %8 = arith.maximumf %6, %7 : vector<64x256xf32>
    %c0_7 = arith.constant 0 : index
    %c0_8 = arith.constant 0 : index
    %9 = vector.load %arg5[%c0_7, %c0_8] : memref<1x128xf32, #tpu.memory_space<vmem>>, vector<1x128xf32>
    %10 = vector.extract_strided_slice %8 {offsets = [0, 0], sizes = [8, 256], strides = [1, 1]} : vector<64x256xf32> to vector<8x256xf32>
    %c0_9 = arith.constant 0 : index
    %c0_10 = arith.constant 0 : index
    %c0_11 = arith.constant 0 : index
    %11 = vector.load %arg4[%c0_9, %c0_10, %c0_11] : memref<5x256x128xf32, #tpu.memory_space<vmem>>, vector<1x256x128xf32>
    %12 = vector.shape_cast %11 : vector<1x256x128xf32> to vector<256x128xf32>
    %cst_12 = arith.constant dense<0.000000e+00> : vector<8x128xf32>
    %13 = tpu.matmul %10, %12, %cst_12 {dimension_numbers = #tpu.dot_dimension_numbers<[1], [0], [0], [1], [0, 0, 1, 1], [], []>} : vector<8x256xf32>, vector<256x128xf32>, vector<8x128xf32> -> vector<8x128xf32>
    %14 = vector.extract_strided_slice %8 {offsets = [8, 0], sizes = [8, 256], strides = [1, 1]} : vector<64x256xf32> to vector<8x256xf32>
    %c1 = arith.constant 1 : index
    %c0_13 = arith.constant 0 : index
    %c0_14 = arith.constant 0 : index
    %15 = vector.load %arg4[%c1, %c0_13, %c0_14] : memref<5x256x128xf32, #tpu.memory_space<vmem>>, vector<1x256x128xf32>
    %16 = vector.shape_cast %15 : vector<1x256x128xf32> to vector<256x128xf32>
    %cst_15 = arith.constant dense<0.000000e+00> : vector<8x128xf32>
    %17 = tpu.matmul %14, %16, %cst_15 {dimension_numbers = #tpu.dot_dimension_numbers<[1], [0], [0], [1], [0, 0, 1, 1], [], []>} : vector<8x256xf32>, vector<256x128xf32>, vector<8x128xf32> -> vector<8x128xf32>
    %18 = arith.addf %13, %17 : vector<8x128xf32>
    %19 = vector.extract_strided_slice %8 {offsets = [16, 0], sizes = [8, 256], strides = [1, 1]} : vector<64x256xf32> to vector<8x256xf32>
    %c2 = arith.constant 2 : index
    %c0_16 = arith.constant 0 : index
    %c0_17 = arith.constant 0 : index
    %20 = vector.load %arg4[%c2, %c0_16, %c0_17] : memref<5x256x128xf32, #tpu.memory_space<vmem>>, vector<1x256x128xf32>
    %21 = vector.shape_cast %20 : vector<1x256x128xf32> to vector<256x128xf32>
    %cst_18 = arith.constant dense<0.000000e+00> : vector<8x128xf32>
    %22 = tpu.matmul %19, %21, %cst_18 {dimension_numbers = #tpu.dot_dimension_numbers<[1], [0], [0], [1], [0, 0, 1, 1], [], []>} : vector<8x256xf32>, vector<256x128xf32>, vector<8x128xf32> -> vector<8x128xf32>
    %23 = arith.addf %18, %22 : vector<8x128xf32>
    %24 = vector.extract_strided_slice %8 {offsets = [24, 0], sizes = [8, 256], strides = [1, 1]} : vector<64x256xf32> to vector<8x256xf32>
    %c3 = arith.constant 3 : index
    %c0_19 = arith.constant 0 : index
    %c0_20 = arith.constant 0 : index
    %25 = vector.load %arg4[%c3, %c0_19, %c0_20] : memref<5x256x128xf32, #tpu.memory_space<vmem>>, vector<1x256x128xf32>
    %26 = vector.shape_cast %25 : vector<1x256x128xf32> to vector<256x128xf32>
    %cst_21 = arith.constant dense<0.000000e+00> : vector<8x128xf32>
    %27 = tpu.matmul %24, %26, %cst_21 {dimension_numbers = #tpu.dot_dimension_numbers<[1], [0], [0], [1], [0, 0, 1, 1], [], []>} : vector<8x256xf32>, vector<256x128xf32>, vector<8x128xf32> -> vector<8x128xf32>
    %28 = arith.addf %23, %27 : vector<8x128xf32>
    %29 = vector.extract_strided_slice %8 {offsets = [32, 0], sizes = [8, 256], strides = [1, 1]} : vector<64x256xf32> to vector<8x256xf32>
    %c4 = arith.constant 4 : index
    %c0_22 = arith.constant 0 : index
    %c0_23 = arith.constant 0 : index
    %30 = vector.load %arg4[%c4, %c0_22, %c0_23] : memref<5x256x128xf32, #tpu.memory_space<vmem>>, vector<1x256x128xf32>
    %31 = vector.shape_cast %30 : vector<1x256x128xf32> to vector<256x128xf32>
    %cst_24 = arith.constant dense<0.000000e+00> : vector<8x128xf32>
    %32 = tpu.matmul %29, %31, %cst_24 {dimension_numbers = #tpu.dot_dimension_numbers<[1], [0], [0], [1], [0, 0, 1, 1], [], []>} : vector<8x256xf32>, vector<256x128xf32>, vector<8x128xf32> -> vector<8x128xf32>
    %33 = arith.addf %28, %32 : vector<8x128xf32>
    %34 = vector.broadcast %9 : vector<1x128xf32> to vector<8x128xf32>
    %35 = arith.addf %33, %34 : vector<8x128xf32>
    %cst_25 = arith.constant 0.000000e+00 : f32
    %36 = vector.broadcast %cst_25 : f32 to vector<8x128xf32>
    %37 = arith.maximumf %35, %36 : vector<8x128xf32>
    %38 = vector.extract_strided_slice %8 {offsets = [24, 0], sizes = [8, 256], strides = [1, 1]} : vector<64x256xf32> to vector<8x256xf32>
    %c0_26 = arith.constant 0 : index
    %c0_27 = arith.constant 0 : index
    %c0_28 = arith.constant 0 : index
    %39 = vector.load %arg4[%c0_26, %c0_27, %c0_28] : memref<5x256x128xf32, #tpu.memory_space<vmem>>, vector<1x256x128xf32>
    %40 = vector.shape_cast %39 : vector<1x256x128xf32> to vector<256x128xf32>
    %cst_29 = arith.constant dense<0.000000e+00> : vector<8x128xf32>
    %41 = tpu.matmul %38, %40, %cst_29 {dimension_numbers = #tpu.dot_dimension_numbers<[1], [0], [0], [1], [0, 0, 1, 1], [], []>} : vector<8x256xf32>, vector<256x128xf32>, vector<8x128xf32> -> vector<8x128xf32>
    %42 = vector.extract_strided_slice %8 {offsets = [32, 0], sizes = [8, 256], strides = [1, 1]} : vector<64x256xf32> to vector<8x256xf32>
    %c1_30 = arith.constant 1 : index
    %c0_31 = arith.constant 0 : index
    %c0_32 = arith.constant 0 : index
    %43 = vector.load %arg4[%c1_30, %c0_31, %c0_32] : memref<5x256x128xf32, #tpu.memory_space<vmem>>, vector<1x256x128xf32>
    %44 = vector.shape_cast %43 : vector<1x256x128xf32> to vector<256x128xf32>
    %cst_33 = arith.constant dense<0.000000e+00> : vector<8x128xf32>
    %45 = tpu.matmul %42, %44, %cst_33 {dimension_numbers = #tpu.dot_dimension_numbers<[1], [0], [0], [1], [0, 0, 1, 1], [], []>} : vector<8x256xf32>, vector<256x128xf32>, vector<8x128xf32> -> vector<8x128xf32>
    %46 = arith.addf %41, %45 : vector<8x128xf32>
    %47 = vector.extract_strided_slice %8 {offsets = [40, 0], sizes = [8, 256], strides = [1, 1]} : vector<64x256xf32> to vector<8x256xf32>
    %c2_34 = arith.constant 2 : index
    %c0_35 = arith.constant 0 : index
    %c0_36 = arith.constant 0 : index
    %48 = vector.load %arg4[%c2_34, %c0_35, %c0_36] : memref<5x256x128xf32, #tpu.memory_space<vmem>>, vector<1x256x128xf32>
    %49 = vector.shape_cast %48 : vector<1x256x128xf32> to vector<256x128xf32>
    %cst_37 = arith.constant dense<0.000000e+00> : vector<8x128xf32>
    %50 = tpu.matmul %47, %49, %cst_37 {dimension_numbers = #tpu.dot_dimension_numbers<[1], [0], [0], [1], [0, 0, 1, 1], [], []>} : vector<8x256xf32>, vector<256x128xf32>, vector<8x128xf32> -> vector<8x128xf32>
    %51 = arith.addf %46, %50 : vector<8x128xf32>
    %52 = vector.extract_strided_slice %8 {offsets = [48, 0], sizes = [8, 256], strides = [1, 1]} : vector<64x256xf32> to vector<8x256xf32>
    %c3_38 = arith.constant 3 : index
    %c0_39 = arith.constant 0 : index
    %c0_40 = arith.constant 0 : index
    %53 = vector.load %arg4[%c3_38, %c0_39, %c0_40] : memref<5x256x128xf32, #tpu.memory_space<vmem>>, vector<1x256x128xf32>
    %54 = vector.shape_cast %53 : vector<1x256x128xf32> to vector<256x128xf32>
    %cst_41 = arith.constant dense<0.000000e+00> : vector<8x128xf32>
    %55 = tpu.matmul %52, %54, %cst_41 {dimension_numbers = #tpu.dot_dimension_numbers<[1], [0], [0], [1], [0, 0, 1, 1], [], []>} : vector<8x256xf32>, vector<256x128xf32>, vector<8x128xf32> -> vector<8x128xf32>
    %56 = arith.addf %51, %55 : vector<8x128xf32>
    %57 = vector.extract_strided_slice %8 {offsets = [56, 0], sizes = [8, 256], strides = [1, 1]} : vector<64x256xf32> to vector<8x256xf32>
    %c4_42 = arith.constant 4 : index
    %c0_43 = arith.constant 0 : index
    %c0_44 = arith.constant 0 : index
    %58 = vector.load %arg4[%c4_42, %c0_43, %c0_44] : memref<5x256x128xf32, #tpu.memory_space<vmem>>, vector<1x256x128xf32>
    %59 = vector.shape_cast %58 : vector<1x256x128xf32> to vector<256x128xf32>
    %cst_45 = arith.constant dense<0.000000e+00> : vector<8x128xf32>
    %60 = tpu.matmul %57, %59, %cst_45 {dimension_numbers = #tpu.dot_dimension_numbers<[1], [0], [0], [1], [0, 0, 1, 1], [], []>} : vector<8x256xf32>, vector<256x128xf32>, vector<8x128xf32> -> vector<8x128xf32>
    %61 = arith.addf %56, %60 : vector<8x128xf32>
    %62 = vector.broadcast %9 : vector<1x128xf32> to vector<8x128xf32>
    %63 = arith.addf %61, %62 : vector<8x128xf32>
    %cst_46 = arith.constant 0.000000e+00 : f32
    %64 = vector.broadcast %cst_46 : f32 to vector<8x128xf32>
    %65 = arith.maximumf %63, %64 : vector<8x128xf32>
    %66 = tpu.concatenate %37, %65 in 1 : vector<8x128xf32>, vector<8x128xf32> -> vector<8x256xf32>
    %c0_47 = arith.constant 0 : index
    %c0_48 = arith.constant 0 : index
    %67 = vector.load %arg6[%c0_47, %c0_48] : memref<256x128xf32, #tpu.memory_space<vmem>>, vector<256x128xf32>
    %cst_49 = arith.constant dense<0.000000e+00> : vector<8x128xf32>
    %68 = tpu.matmul %66, %67, %cst_49 {dimension_numbers = #tpu.dot_dimension_numbers<[1], [0], [0], [1], [0, 0, 1, 1], [], []>} : vector<8x256xf32>, vector<256x128xf32>, vector<8x128xf32> -> vector<8x128xf32>
    %c0_50 = arith.constant 0 : index
    %c0_51 = arith.constant 0 : index
    %69 = vector.load %arg7[%c0_50, %c0_51] : memref<1x128xf32, #tpu.memory_space<vmem>>, vector<1x128xf32>
    %70 = vector.broadcast %69 : vector<1x128xf32> to vector<8x128xf32>
    %71 = arith.addf %68, %70 : vector<8x128xf32>
    %c0_52 = arith.constant 0 : index
    %c0_53 = arith.constant 0 : index
    %72 = vector.load %arg8[%c0_52, %c0_53] : memref<8x128xf32, #tpu.memory_space<vmem>>, vector<8x128xf32>
    tpu.vector_store %arg8[%c0_52, %c0_53], %71 {strides = array<i32>} : memref<8x128xf32, #tpu.memory_space<vmem>>, vector<8x128xf32>,
    return
  }
  func.func @transform_0(%arg0: i32) -> (i32, i32, i32) {
    %c0_i32 = arith.constant 0 : i32
    %c0_i32_0 = arith.constant 0 : i32
    %c0_i32_1 = arith.constant 0 : i32
    return %arg0, %c0_i32, %c0_i32_0 : i32, i32, i32
  }
  func.func @transform_1(%arg0: i32) -> (i32, i32) {
    %c0_i32 = arith.constant 0 : i32
    %c0_i32_0 = arith.constant 0 : i32
    %c0_i32_1 = arith.constant 0 : i32
    return %c0_i32, %c0_i32_0 : i32, i32
  }
  func.func @transform_2(%arg0: i32) -> (i32, i32) {
    %c0_i32 = arith.constant 0 : i32
    %c0_i32_0 = arith.constant 0 : i32
    %c0_i32_1 = arith.constant 0 : i32
    return %c0_i32, %c0_i32_0 : i32, i32
  }
  func.func @transform_3(%arg0: i32) -> (i32, i32, i32) {
    %c0_i32 = arith.constant 0 : i32
    %c0_i32_0 = arith.constant 0 : i32
    %c0_i32_1 = arith.constant 0 : i32
    %c0_i32_2 = arith.constant 0 : i32
    return %c0_i32, %c0_i32_0, %c0_i32_1 : i32, i32, i32
  }
  func.func @transform_4(%arg0: i32) -> (i32, i32) {
    %c0_i32 = arith.constant 0 : i32
    %c0_i32_0 = arith.constant 0 : i32
    %c0_i32_1 = arith.constant 0 : i32
    return %c0_i32, %c0_i32_0 : i32, i32
  }
  func.func @transform_5(%arg0: i32) -> (i32, i32) {
    %c0_i32 = arith.constant 0 : i32
    %c0_i32_0 = arith.constant 0 : i32
    %c0_i32_1 = arith.constant 0 : i32
    return %c0_i32, %c0_i32_0 : i32, i32
  }
  func.func @transform_6(%arg0: i32) -> (i32, i32) {
    %c0_i32 = arith.constant 0 : i32
    %c0_i32_0 = arith.constant 0 : i32
    %c0_i32_1 = arith.constant 0 : i32
    return %c0_i32, %c0_i32_0 : i32, i32
  }
  func.func @transform_7(%arg0: i32) -> (i32, i32) {
    %c0_i32 = arith.constant 0 : i32
    %c0_i32_0 = arith.constant 0 : i32
    return %arg0, %c0_i32 : i32, i32
  }
}

</mosaic_0001>

<llo_original>
// kernel: convnet_forward.1
$region0: #{convnet_forward.1}
  #allocation0 [shape = 'u32[]', space=smem, size = 0x4, offset = 0x4, fixed_abs, tag = 'smem constant byte address 0x4 - core index']
  #allocation1 [shape = 'u32[144,128]{1,0:T(1,128)}', space=vmem, size = 0x12000, scoped, tag = 'internal scratch']
  %s0 = inlined_call_operand.vmem [shape: f32[1,64,160], index: 0, kind: input, shape index: {}]
  %s1 = inlined_call_operand.hbm [shape: f32[160,256], index: 1, kind: input, shape index: {}]
  %s2 = inlined_call_operand.vmem [shape: f32[1,256], index: 2, kind: input, shape index: {}]
  %s3 = inlined_call_operand.vmem [shape: f32[5,256,128], index: 3, kind: input, shape index: {}]
  %s4 = inlined_call_operand.vmem [shape: f32[1,128], index: 4, kind: input, shape index: {}]
  %s5 = inlined_call_operand.vmem [shape: f32[256,128], index: 5, kind: input, shape index: {}]
  %s6 = inlined_call_operand.vmem [shape: f32[1,128], index: 6, kind: input, shape index: {}]
  %s7 = inlined_call_operand.vmem [shape: f32[8,128], index: 7, kind: output, shape index: {}]
  %s8 = sld [smem:[#allocation0]]
  $region42: #{convnet_forward.1} parent=0
    _
  %s10 = ssub.s32 1, %s8
  %s11 = scalar_select 0, %s10, %s8
  $region1: #{convnet_forward.1} parent=0
    #allocation2 [shape = 'u8[163840]{0}', space=vmem, size = 0x28000, scoped, tag = 'input window, operand 1, single buffered']
    #allocation3 [shape = 's32[1]{0}', space=sflag, size = 0x4, scoped, tag = 'scoped memory for convnet_forward.1']
    %12 = vsyncpa [#allocation3], 0
    // Predicated region
    $region2: #{convnet_forward.1} parent=1 // pred_check
      _
    $region3: #{convnet_forward.1} parent=1 // pred_check_branch
      %14 = sbr.rel (0) target = $region5
    $region4: #{convnet_forward.1} parent=1 // pred_region
      _
    $region5: #{convnet_forward.1} parent=1 // pred_fallthru
      _
    // Predicated region
    $region6: #{convnet_forward.1} parent=1 // pred_check
      _
    $region7: #{convnet_forward.1} parent=1 // pred_check_branch
      %16 = sbr.rel (0) target = $region9
    $region8: #{convnet_forward.1} parent=1 // pred_region
      %s18 = ssub.s32 5120, 5120
      %19 = vsyncadd [#allocation3], %s18
      %s20 = sshll.u32 [#allocation2], 4
      %s21 = int_to_ptr.vmem [resolvable:$true] %s20
      %26 = dma.hbm_to_vmem [thread:$0]  %s1, 5120, %s21, [#allocation3], 256, 256, 16
    $region9: #{convnet_forward.1} parent=1 // pred_fallthru
      _
    // Predicated region
    $region10: #{convnet_forward.1} parent=1 // pred_check
      _
    $region11: #{convnet_forward.1} parent=1 // pred_check_branch
      %28 = sbr.rel (0) target = $region13
    $region12: #{convnet_forward.1} parent=1 // pred_region
      _
    $region13: #{convnet_forward.1} parent=1 // pred_fallthru
      _
    // Predicated region
    $region14: #{convnet_forward.1} parent=1 // pred_check
      _
    $region15: #{convnet_forward.1} parent=1 // pred_check_branch
      %30 = sbr.rel (0) target = $region17
    $region16: #{convnet_forward.1} parent=1 // pred_region
      _
    $region17: #{convnet_forward.1} parent=1 // pred_fallthru
      _
    // Predicated region
    $region18: #{convnet_forward.1} parent=1 // pred_check
      _
    $region19: #{convnet_forward.1} parent=1 // pred_check_branch
      %32 = sbr.rel (0) target = $region21
    $region20: #{convnet_forward.1} parent=1 // pred_region
      _
    $region21: #{convnet_forward.1} parent=1 // pred_fallthru
      _
    // Predicated region
    $region22: #{convnet_forward.1} parent=1 // pred_check
      _
    $region23: #{convnet_forward.1} parent=1 // pred_check_branch
      %34 = sbr.rel (0) target = $region25
    $region24: #{convnet_forward.1} parent=1 // pred_region
      _
    $region25: #{convnet_forward.1} parent=1 // pred_fallthru
      _
    // Predicated region
    $region26: #{convnet_forward.1} parent=1 // pred_check
      _
    $region27: #{convnet_forward.1} parent=1 // pred_check_branch
      %36 = sbr.rel (0) target = $region29
    $region28: #{convnet_forward.1} parent=1 // pred_region
      _
    $region29: #{convnet_forward.1} parent=1 // pred_fallthru
      _
    // Predicated region
    $region30: #{convnet_forward.1} parent=1 // pred_check
      _
    $region31: #{convnet_forward.1} parent=1 // pred_check_branch
      %38 = sbr.rel (0) target = $region33
    $region32: #{convnet_forward.1} parent=1 // pred_region
      %39 = dma.done [#allocation3], 5120
    $region33: #{convnet_forward.1} parent=1 // pred_fallthru
      _
    %v40 = vld [vmem:[%s0] sm:$0xff]
    %v41 = vld [vmem:[%s0 + $0x8] sm:$0xff]
    %v42 = vld [vmem:[%s0 + $0x10] sm:$0xff]
    %v43 = vld [vmem:[%s0 + $0x18] sm:$0xff]
    %v44 = vld [vmem:[%s0 + $0x20] sm:$0xff]
    %v45 = vld [vmem:[%s0 + $0x28] sm:$0xff]
    %v46 = vld [vmem:[%s0 + $0x30] sm:$0xff]
    %v47 = vld [vmem:[%s0 + $0x38] sm:$0xff]
    %v48 = vld [vmem:[%s0 + $0x40] sm:$0xff]
    %v49 = vld [vmem:[%s0 + $0x48] sm:$0xff]
    %v50 = vld [vmem:[%s0 + $0x50] sm:$0xff]
    %v51 = vld [vmem:[%s0 + $0x58] sm:$0xff]
    %v52 = vld [vmem:[%s0 + $0x60] sm:$0xff]
    %v53 = vld [vmem:[%s0 + $0x68] sm:$0xff]
    %v54 = vld [vmem:[%s0 + $0x70] sm:$0xff]
    %v55 = vld [vmem:[%s0 + $0x78] sm:$0xff]
    %v56 = vld [vmem:[#allocation2] sm:$0xff]
    %v57 = vld [vmem:[#allocation2 + $0x8] sm:$0xff]
    %v58 = vld [vmem:[#allocation2 + $0x10] sm:$0xff]
    %v59 = vld [vmem:[#allocation2 + $0x18] sm:$0xff]
    %v60 = vld [vmem:[#allocation2 + $0x20] sm:$0xff]
    %v61 = vld [vmem:[#allocation2 + $0x28] sm:$0xff]
    %v62 = vld [vmem:[#allocation2 + $0x30] sm:$0xff]
    %v63 = vld [vmem:[#allocation2 + $0x38] sm:$0xff]
    %v64 = vld [vmem:[#allocation2 + $0x40] sm:$0xff]
    %v65 = vld [vmem:[#allocation2 + $0x48] sm:$0xff]
    %v66 = vld [vmem:[#allocation2 + $0x50] sm:$0xff]
    %v67 = vld [vmem:[#allocation2 + $0x58] sm:$0xff]
    %v68 = vld [vmem:[#allocation2 + $0x60] sm:$0xff]
    %v69 = vld [vmem:[#allocation2 + $0x68] sm:$0xff]
    %v70 = vld [vmem:[#allocation2 + $0x70] sm:$0xff]
    %v71 = vld [vmem:[#allocation2 + $0x78] sm:$0xff]
    %v72 = vld [vmem:[#allocation2 + $0x80] sm:$0xff]
    %v73 = vld [vmem:[#allocation2 + $0x88] sm:$0xff]
    %v74 = vld [vmem:[#allocation2 + $0x90] sm:$0xff]
    %v75 = vld [vmem:[#allocation2 + $0x98] sm:$0xff]
    %v76 = vld [vmem:[#allocation2 + $0xa0] sm:$0xff]
    %v77 = vld [vmem:[#allocation2 + $0xa8] sm:$0xff]
    %v78 = vld [vmem:[#allocation2 + $0xb0] sm:$0xff]
    %v79 = vld [vmem:[#allocation2 + $0xb8] sm:$0xff]
    %v80 = vld [vmem:[#allocation2 + $0xc0] sm:$0xff]
    %v81 = vld [vmem:[#allocation2 + $0xc8] sm:$0xff]
    %v82 = vld [vmem:[#allocation2 + $0xd0] sm:$0xff]
    %v83 = vld [vmem:[#allocation2 + $0xd8] sm:$0xff]
    %v84 = vld [vmem:[#allocation2 + $0xe0] sm:$0xff]
    %v85 = vld [vmem:[#allocation2 + $0xe8] sm:$0xff]
    %v86 = vld [vmem:[#allocation2 + $0xf0] sm:$0xff]
    %v87 = vld [vmem:[#allocation2 + $0xf8] sm:$0xff]
    %v88 = vld [vmem:[#allocation2 + $0x100] sm:$0xff]
    %v89 = vld [vmem:[#allocation2 + $0x108] sm:$0xff]
    %v90 = vld [vmem:[#allocation2 + $0x110] sm:$0xff]
    %v91 = vld [vmem:[#allocation2 + $0x118] sm:$0xff]
    %v92 = vld [vmem:[#allocation2 + $0x120] sm:$0xff]
    %v93 = vld [vmem:[#allocation2 + $0x128] sm:$0xff]
    %v94 = vld [vmem:[#allocation2 + $0x130] sm:$0xff]
    %v95 = vld [vmem:[#allocation2 + $0x138] sm:$0xff]
    %v96 = vld [vmem:[%s2] sm:$0x3]
    %v98 = vlaneseq
    %v99 = vshrl.u32 %v98, 7
    %v100 = vsub.s32 0, %v99
    %v101 = vrot.slane %v96, %v100
    %v102 = vlaneseq
    %v103 = vshrl.u32 %v102, 7
    %v104 = vsub.s32 1, %v103
    %v105 = vrot.slane %v96, %v104
    %vm108 = vcmask 261120
    %v110 = vsel %vm108, %v41, 0
    %v113 = vsel %vm108, %v43, 0
    %v116 = vsel %vm108, %v45, 0
    %v119 = vsel %vm108, %v47, 0
    %v122 = vsel %vm108, %v49, 0
    %v125 = vsel %vm108, %v51, 0
    %v128 = vsel %vm108, %v53, 0
    %v131 = vsel %vm108, %v55, 0
    %133 = vmatprep.subr.mxu0 %v87
    %134 = vmatpush1.msra.mxu0 %v86
    %135 = vmatprep.subr.mxu0 %v85
    %136 = vmatpush1.msra.mxu0 %v84
    %137 = vmatprep.subr.mxu0 %v83
    %138 = vmatpush1.msra.mxu0 %v82
    %139 = vmatprep.subr.mxu0 %v81
    %140 = vmatpush1.msra.mxu0 %v80
    %141 = vmatprep.subr.mxu0 %v79
    %142 = vmatpush1.msra.mxu0 %v78
    %143 = vmatprep.subr.mxu0 %v77
    %144 = vmatpush1.msra.mxu0 %v76
    %145 = vmatprep.subr.mxu0 %v75
    %146 = vmatpush1.msra.mxu0 %v74
    %147 = vmatprep.subr.mxu0 %v73
    %148 = vmatpush1.msra.mxu0 %v72
    %149 = vmatprep.subr.mxu0 %v71
    %150 = vmatpush1.msra.mxu0 %v70
    %151 = vmatprep.subr.mxu0 %v69
    %152 = vmatpush1.msra.mxu0 %v68
    %153 = vmatprep.subr.mxu0 %v67
    %154 = vmatpush1.msra.mxu0 %v66
    %155 = vmatprep.subr.mxu0 %v65
    %156 = vmatpush1.msra.mxu0 %v64
    %157 = vmatprep.subr.mxu0 %v63
    %158 = vmatpush1.msra.mxu0 %v62
    %159 = vmatprep.subr.mxu0 %v61
    %160 = vmatpush1.msra.mxu0 %v60
    %161 = vmatprep.subr.mxu0 %v59
    %162 = vmatpush1.msra.mxu0 %v58
    %163 = vmatprep.subr.mxu0 %v57
    %164 = vmatpush1.msra.mxu0 %v56
    %165 = vmatprep.subr.mxu0 0.0
    %166 = vmatpush2.msra.mxu0 0.0
    %167 = vmatprep.subr.mxu0 0.0
    %168 = vmatpush2.msra.mxu0 0.0
    %169 = vmatprep.subr.mxu0 0.0
    %170 = vmatpush2.msra.mxu0 0.0
    %171 = vmatprep.subr.mxu0 0.0
    %172 = vmatpush2.msra.mxu0 0.0
    %173 = vmatprep.subr.mxu0 0.0
    %174 = vmatpush2.msra.mxu0 0.0
    %175 = vmatprep.subr.mxu0 0.0
    %176 = vmatpush2.msra.mxu0 0.0
    %177 = vmatprep.subr.mxu0 0.0
    %178 = vmatpush2.msra.mxu0 0.0
    %179 = vmatprep.subr.mxu0 0.0
    %180 = vmatpush2.msra.mxu0 0.0
    %181 = vmatprep.subr.mxu0 0.0
    %182 = vmatpush2.msra.mxu0 0.0
    %183 = vmatprep.subr.mxu0 0.0
    %184 = vmatpush2.msra.mxu0 0.0
    %185 = vmatprep.subr.mxu0 0.0
    %186 = vmatpush2.msra.mxu0 0.0
    %187 = vmatprep.subr.mxu0 0.0
    %188 = vmatpush2.msra.mxu0 0.0
    %189 = vmatprep.subr.mxu0 %v95
    %190 = vmatpush2.msra.mxu0 %v94
    %191 = vmatprep.subr.mxu0 %v93
    %192 = vmatpush2.msra.mxu0 %v92
    %193 = vmatprep.subr.mxu0 %v91
    %194 = vmatpush2.msra.mxu0 %v90
    %195 = vmatprep.subr.mxu0 %v89
    %196 = vmatpush2.msra.mxu0 %v88
    %197 = vmatprep.mubr.f32.mxu0 %v110
    %198 = vmatmul.mubr.f32.gmra.mxu0 %v40
    %v199 = vpop.f32.mrf.mxu0
    %v200 = vadd.f32 %v101, %v199
    %v201 = vpop.f32.mrf.mxu0
    %v202 = vadd.f32 %v105, %v201
    %203 = vmatprep.mubr.f32.mxu0 %v113
    %204 = vmatmul.mubr.f32.gmra.mxu0 %v42
    %v205 = vpop.f32.mrf.mxu0
    %v206 = vadd.f32 %v101, %v205
    %v207 = vpop.f32.mrf.mxu0
    %v208 = vadd.f32 %v105, %v207
    %209 = vmatprep.mubr.f32.mxu0 %v116
    %210 = vmatmul.mubr.f32.gmra.mxu0 %v44
    %v211 = vpop.f32.mrf.mxu0
    %v212 = vadd.f32 %v101, %v211
    %v213 = vpop.f32.mrf.mxu0
    %v214 = vadd.f32 %v105, %v213
    %215 = vmatprep.mubr.f32.mxu0 %v119
    %216 = vmatmul.mubr.f32.gmra.mxu0 %v46
    %v217 = vpop.f32.mrf.mxu0
    %v218 = vadd.f32 %v101, %v217
    %v219 = vpop.f32.mrf.mxu0
    %v220 = vadd.f32 %v105, %v219
    %221 = vmatprep.mubr.f32.mxu0 %v122
    %222 = vmatmul.mubr.f32.gmra.mxu0 %v48
    %v223 = vpop.f32.mrf.mxu0
    %v224 = vadd.f32 %v101, %v223
    %v225 = vpop.f32.mrf.mxu0
    %v226 = vadd.f32 %v105, %v225
    %227 = vmatprep.mubr.f32.mxu0 %v125
    %228 = vmatmul.mubr.f32.gmra.mxu0 %v50
    %v229 = vpop.f32.mrf.mxu0
    %v230 = vadd.f32 %v101, %v229
    %v231 = vpop.f32.mrf.mxu0
    %v232 = vadd.f32 %v105, %v231
    %233 = vmatprep.mubr.f32.mxu0 %v128
    %234 = vmatmul.mubr.f32.gmra.mxu0 %v52
    %v235 = vpop.f32.mrf.mxu0
    %v236 = vadd.f32 %v101, %v235
    %v237 = vpop.f32.mrf.mxu0
    %v238 = vadd.f32 %v105, %v237
    %239 = vmatprep.mubr.f32.mxu0 %v131
    %240 = vmatmul.mubr.f32.gmra.mxu0 %v54
    %v241 = vpop.f32.mrf.mxu0
    %v242 = vadd.f32 %v101, %v241
    %v243 = vpop.f32.mrf.mxu0
    %v244 = vadd.f32 %v105, %v243
    %245 = vdwg.mxu0
    %v246 = vmax.f32 %v200, 0.0
    %v247 = vmax.f32 %v202, 0.0
    %v248 = vmax.f32 %v206, 0.0
    %v249 = vmax.f32 %v208, 0.0
    %v250 = vmax.f32 %v212, 0.0
    %v251 = vmax.f32 %v214, 0.0
    %v252 = vmax.f32 %v218, 0.0
    %v253 = vmax.f32 %v220, 0.0
    %v254 = vmax.f32 %v224, 0.0
    %v255 = vmax.f32 %v226, 0.0
    %v256 = vmax.f32 %v230, 0.0
    %v257 = vmax.f32 %v232, 0.0
    %v258 = vmax.f32 %v236, 0.0
    %v259 = vmax.f32 %v238, 0.0
    %v260 = vmax.f32 %v242, 0.0
    %v261 = vmax.f32 %v244, 0.0
    %v262 = vld [vmem:[%s4] sm:$0x1]
    %v263 = vld [vmem:[%s3] sm:$0xff]
    %v264 = vld [vmem:[%s3 + $0x8] sm:$0xff]
    %v265 = vld [vmem:[%s3 + $0x10] sm:$0xff]
    %v266 = vld [vmem:[%s3 + $0x18] sm:$0xff]
    %v267 = vld [vmem:[%s3 + $0x20] sm:$0xff]
    %v268 = vld [vmem:[%s3 + $0x28] sm:$0xff]
    %v269 = vld [vmem:[%s3 + $0x30] sm:$0xff]
    %v270 = vld [vmem:[%s3 + $0x38] sm:$0xff]
    %v271 = vld [vmem:[%s3 + $0x40] sm:$0xff]
    %v272 = vld [vmem:[%s3 + $0x48] sm:$0xff]
    %v273 = vld [vmem:[%s3 + $0x50] sm:$0xff]
    %v274 = vld [vmem:[%s3 + $0x58] sm:$0xff]
    %v275 = vld [vmem:[%s3 + $0x60] sm:$0xff]
    %v276 = vld [vmem:[%s3 + $0x68] sm:$0xff]
    %v277 = vld [vmem:[%s3 + $0x70] sm:$0xff]
    %v278 = vld [vmem:[%s3 + $0x78] sm:$0xff]
    %v279 = vld [vmem:[%s3 + $0x80] sm:$0xff]
    %v280 = vld [vmem:[%s3 + $0x88] sm:$0xff]
    %v281 = vld [vmem:[%s3 + $0x90] sm:$0xff]
    %v282 = vld [vmem:[%s3 + $0x98] sm:$0xff]
    %v283 = vld [vmem:[%s3 + $0xa0] sm:$0xff]
    %v284 = vld [vmem:[%s3 + $0xa8] sm:$0xff]
    %v285 = vld [vmem:[%s3 + $0xb0] sm:$0xff]
    %v286 = vld [vmem:[%s3 + $0xb8] sm:$0xff]
    %v287 = vld [vmem:[%s3 + $0xc0] sm:$0xff]
    %v288 = vld [vmem:[%s3 + $0xc8] sm:$0xff]
    %v289 = vld [vmem:[%s3 + $0xd0] sm:$0xff]
    %v290 = vld [vmem:[%s3 + $0xd8] sm:$0xff]
    %v291 = vld [vmem:[%s3 + $0xe0] sm:$0xff]
    %v292 = vld [vmem:[%s3 + $0xe8] sm:$0xff]
    %v293 = vld [vmem:[%s3 + $0xf0] sm:$0xff]
    %v294 = vld [vmem:[%s3 + $0xf8] sm:$0xff]
    %s295 = scalar_lea.vmem %s3, 256
    %v296 = vld [vmem:[%s295] sm:$0xff]
    %v297 = vld [vmem:[%s295 + $0x8] sm:$0xff]
    %v298 = vld [vmem:[%s295 + $0x10] sm:$0xff]
    %v299 = vld [vmem:[%s295 + $0x18] sm:$0xff]
    %v300 = vld [vmem:[%s295 + $0x20] sm:$0xff]
    %v301 = vld [vmem:[%s295 + $0x28] sm:$0xff]
    %v302 = vld [vmem:[%s295 + $0x30] sm:$0xff]
    %v303 = vld [vmem:[%s295 + $0x38] sm:$0xff]
    %v304 = vld [vmem:[%s295 + $0x40] sm:$0xff]
    %v305 = vld [vmem:[%s295 + $0x48] sm:$0xff]
    %v306 = vld [vmem:[%s295 + $0x50] sm:$0xff]
    %v307 = vld [vmem:[%s295 + $0x58] sm:$0xff]
    %v308 = vld [vmem:[%s295 + $0x60] sm:$0xff]
    %v309 = vld [vmem:[%s295 + $0x68] sm:$0xff]
    %v310 = vld [vmem:[%s295 + $0x70] sm:$0xff]
    %v311 = vld [vmem:[%s295 + $0x78] sm:$0xff]
    %v312 = vld [vmem:[%s295 + $0x80] sm:$0xff]
    %v313 = vld [vmem:[%s295 + $0x88] sm:$0xff]
    %v314 = vld [vmem:[%s295 + $0x90] sm:$0xff]
    %v315 = vld [vmem:[%s295 + $0x98] sm:$0xff]
    %v316 = vld [vmem:[%s295 + $0xa0] sm:$0xff]
    %v317 = vld [vmem:[%s295 + $0xa8] sm:$0xff]
    %v318 = vld [vmem:[%s295 + $0xb0] sm:$0xff]
    %v319 = vld [vmem:[%s295 + $0xb8] sm:$0xff]
    %v320 = vld [vmem:[%s295 + $0xc0] sm:$0xff]
    %v321 = vld [vmem:[%s295 + $0xc8] sm:$0xff]
    %v322 = vld [vmem:[%s295 + $0xd0] sm:$0xff]
    %v323 = vld [vmem:[%s295 + $0xd8] sm:$0xff]
    %v324 = vld [vmem:[%s295 + $0xe0] sm:$0xff]
    %v325 = vld [vmem:[%s295 + $0xe8] sm:$0xff]
    %v326 = vld [vmem:[%s295 + $0xf0] sm:$0xff]
    %v327 = vld [vmem:[%s295 + $0xf8] sm:$0xff]
    %328 = vmatprep.subr.mxu0 0.0
    %329 = vmatpush1.msra.mxu0 %v311
    %330 = vmatprep.subr.mxu0 0.0
    %331 = vmatpush1.msra.mxu0 %v310
    %332 = vmatprep.subr.mxu0 0.0
    %333 = vmatpush1.msra.mxu0 %v309
    %334 = vmatprep.subr.mxu0 0.0
    %335 = vmatpush1.msra.mxu0 %v308
    %336 = vmatprep.subr.mxu0 0.0
    %337 = vmatpush1.msra.mxu0 %v307
    %338 = vmatprep.subr.mxu0 0.0
    %339 = vmatpush1.msra.mxu0 %v306
    %340 = vmatprep.subr.mxu0 0.0
    %341 = vmatpush1.msra.mxu0 %v305
    %342 = vmatprep.subr.mxu0 0.0
    %343 = vmatpush1.msra.mxu0 %v304
    %344 = vmatprep.subr.mxu0 0.0
    %345 = vmatpush1.msra.mxu0 %v303
    %346 = vmatprep.subr.mxu0 0.0
    %347 = vmatpush1.msra.mxu0 %v302
    %348 = vmatprep.subr.mxu0 0.0
    %349 = vmatpush1.msra.mxu0 %v301
    %350 = vmatprep.subr.mxu0 0.0
    %351 = vmatpush1.msra.mxu0 %v300
    %352 = vmatprep.subr.mxu0 0.0
    %353 = vmatpush1.msra.mxu0 %v299
    %354 = vmatprep.subr.mxu0 0.0
    %355 = vmatpush1.msra.mxu0 %v298
    %356 = vmatprep.subr.mxu0 0.0
    %357 = vmatpush1.msra.mxu0 %v297
    %358 = vmatprep.subr.mxu0 0.0
    %359 = vmatpush1.msra.mxu0 %v296
    %360 = vmatprep.subr.mxu0 0.0
    %361 = vmatpush2.msra.mxu0 %v327
    %362 = vmatprep.subr.mxu0 0.0
    %363 = vmatpush2.msra.mxu0 %v326
    %364 = vmatprep.subr.mxu0 0.0
    %365 = vmatpush2.msra.mxu0 %v325
    %366 = vmatprep.subr.mxu0 0.0
    %367 = vmatpush2.msra.mxu0 %v324
    %368 = vmatprep.subr.mxu0 0.0
    %369 = vmatpush2.msra.mxu0 %v323
    %370 = vmatprep.subr.mxu0 0.0
    %371 = vmatpush2.msra.mxu0 %v322
    %372 = vmatprep.subr.mxu0 0.0
    %373 = vmatpush2.msra.mxu0 %v321
    %374 = vmatprep.subr.mxu0 0.0
    %375 = vmatpush2.msra.mxu0 %v320
    %376 = vmatprep.subr.mxu0 0.0
    %377 = vmatpush2.msra.mxu0 %v319
    %378 = vmatprep.subr.mxu0 0.0
    %379 = vmatpush2.msra.mxu0 %v318
    %380 = vmatprep.subr.mxu0 0.0
    %381 = vmatpush2.msra.mxu0 %v317
    %382 = vmatprep.subr.mxu0 0.0
    %383 = vmatpush2.msra.mxu0 %v316
    %384 = vmatprep.subr.mxu0 0.0
    %385 = vmatpush2.msra.mxu0 %v315
    %386 = vmatprep.subr.mxu0 0.0
    %387 = vmatpush2.msra.mxu0 %v314
    %388 = vmatprep.subr.mxu0 0.0
    %389 = vmatpush2.msra.mxu0 %v313
    %390 = vmatprep.subr.mxu0 0.0
    %391 = vmatpush2.msra.mxu0 %v312
    %392 = vmatprep.mubr.f32.mxu0 %v249
    %393 = vmatmul.mubr.f32.gmra.mxu0 %v248
    %v394 = vpop.f32.mrf.mxu0
    %v395 = vadd.f32 0.0, %v394
    %v396 = vpop.f32.mrf.mxu0
    %397 = vdwg.mxu0
    %398 = vmatprep.subr.mxu0 0.0
    %399 = vmatpush1.msra.mxu0 %v278
    %400 = vmatprep.subr.mxu0 0.0
    %401 = vmatpush1.msra.mxu0 %v277
    %402 = vmatprep.subr.mxu0 0.0
    %403 = vmatpush1.msra.mxu0 %v276
    %404 = vmatprep.subr.mxu0 0.0
    %405 = vmatpush1.msra.mxu0 %v275
    %406 = vmatprep.subr.mxu0 0.0
    %407 = vmatpush1.msra.mxu0 %v274
    %408 = vmatprep.subr.mxu0 0.0
    %409 = vmatpush1.msra.mxu0 %v273
    %410 = vmatprep.subr.mxu0 0.0
    %411 = vmatpush1.msra.mxu0 %v272
    %412 = vmatprep.subr.mxu0 0.0
    %413 = vmatpush1.msra.mxu0 %v271
    %414 = vmatprep.subr.mxu0 0.0
    %415 = vmatpush1.msra.mxu0 %v270
    %416 = vmatprep.subr.mxu0 0.0
    %417 = vmatpush1.msra.mxu0 %v269
    %418 = vmatprep.subr.mxu0 0.0
    %419 = vmatpush1.msra.mxu0 %v268
    %420 = vmatprep.subr.mxu0 0.0
    %421 = vmatpush1.msra.mxu0 %v267
    %422 = vmatprep.subr.mxu0 0.0
    %423 = vmatpush1.msra.mxu0 %v266
    %424 = vmatprep.subr.mxu0 0.0
    %425 = vmatpush1.msra.mxu0 %v265
    %426 = vmatprep.subr.mxu0 0.0
    %427 = vmatpush1.msra.mxu0 %v264
    %428 = vmatprep.subr.mxu0 0.0
    %429 = vmatpush1.msra.mxu0 %v263
    %430 = vmatprep.subr.mxu0 0.0
    %431 = vmatpush2.msra.mxu0 %v294
    %432 = vmatprep.subr.mxu0 0.0
    %433 = vmatpush2.msra.mxu0 %v293
    %434 = vmatprep.subr.mxu0 0.0
    %435 = vmatpush2.msra.mxu0 %v292
    %436 = vmatprep.subr.mxu0 0.0
    %437 = vmatpush2.msra.mxu0 %v291
    %438 = vmatprep.subr.mxu0 0.0
    %439 = vmatpush2.msra.mxu0 %v290
    %440 = vmatprep.subr.mxu0 0.0
    %441 = vmatpush2.msra.mxu0 %v289
    %442 = vmatprep.subr.mxu0 0.0
    %443 = vmatpush2.msra.mxu0 %v288
    %444 = vmatprep.subr.mxu0 0.0
    %445 = vmatpush2.msra.mxu0 %v287
    %446 = vmatprep.subr.mxu0 0.0
    %447 = vmatpush2.msra.mxu0 %v286
    %448 = vmatprep.subr.mxu0 0.0
    %449 = vmatpush2.msra.mxu0 %v285
    %450 = vmatprep.subr.mxu0 0.0
    %451 = vmatpush2.msra.mxu0 %v284
    %452 = vmatprep.subr.mxu0 0.0
    %453 = vmatpush2.msra.mxu0 %v283
    %454 = vmatprep.subr.mxu0 0.0
    %455 = vmatpush2.msra.mxu0 %v282
    %456 = vmatprep.subr.mxu0 0.0
    %457 = vmatpush2.msra.mxu0 %v281
    %458 = vmatprep.subr.mxu0 0.0
    %459 = vmatpush2.msra.mxu0 %v280
    %460 = vmatprep.subr.mxu0 0.0
    %461 = vmatpush2.msra.mxu0 %v279
    %462 = vmatprep.mubr.f32.mxu0 %v247
    %463 = vmatmul.mubr.f32.gmra.mxu0 %v246
    %v464 = vpop.f32.mrf.mxu0
    %v465 = vadd.f32 %v395, %v464
    %v466 = vpop.f32.mrf.mxu0
    %467 = vdwg.mxu0
    %s468 = scalar_lea.vmem %s3, 512
    %v469 = vld [vmem:[%s468] sm:$0xff]
    %v470 = vld [vmem:[%s468 + $0x8] sm:$0xff]
    %v471 = vld [vmem:[%s468 + $0x10] sm:$0xff]
    %v472 = vld [vmem:[%s468 + $0x18] sm:$0xff]
    %v473 = vld [vmem:[%s468 + $0x20] sm:$0xff]
    %v474 = vld [vmem:[%s468 + $0x28] sm:$0xff]
    %v475 = vld [vmem:[%s468 + $0x30] sm:$0xff]
    %v476 = vld [vmem:[%s468 + $0x38] sm:$0xff]
    %v477 = vld [vmem:[%s468 + $0x40] sm:$0xff]
    %v478 = vld [vmem:[%s468 + $0x48] sm:$0xff]
    %v479 = vld [vmem:[%s468 + $0x50] sm:$0xff]
    %v480 = vld [vmem:[%s468 + $0x58] sm:$0xff]
    %v481 = vld [vmem:[%s468 + $0x60] sm:$0xff]
    %v482 = vld [vmem:[%s468 + $0x68] sm:$0xff]
    %v483 = vld [vmem:[%s468 + $0x70] sm:$0xff]
    %v484 = vld [vmem:[%s468 + $0x78] sm:$0xff]
    %v485 = vld [vmem:[%s468 + $0x80] sm:$0xff]
    %v486 = vld [vmem:[%s468 + $0x88] sm:$0xff]
    %v487 = vld [vmem:[%s468 + $0x90] sm:$0xff]
    %v488 = vld [vmem:[%s468 + $0x98] sm:$0xff]
    %v489 = vld [vmem:[%s468 + $0xa0] sm:$0xff]
    %v490 = vld [vmem:[%s468 + $0xa8] sm:$0xff]
    %v491 = vld [vmem:[%s468 + $0xb0] sm:$0xff]
    %v492 = vld [vmem:[%s468 + $0xb8] sm:$0xff]
    %v493 = vld [vmem:[%s468 + $0xc0] sm:$0xff]
    %v494 = vld [vmem:[%s468 + $0xc8] sm:$0xff]
    %v495 = vld [vmem:[%s468 + $0xd0] sm:$0xff]
    %v496 = vld [vmem:[%s468 + $0xd8] sm:$0xff]
    %v497 = vld [vmem:[%s468 + $0xe0] sm:$0xff]
    %v498 = vld [vmem:[%s468 + $0xe8] sm:$0xff]
    %v499 = vld [vmem:[%s468 + $0xf0] sm:$0xff]
    %v500 = vld [vmem:[%s468 + $0xf8] sm:$0xff]
    %501 = vmatprep.subr.mxu0 0.0
    %502 = vmatpush1.msra.mxu0 %v484
    %503 = vmatprep.subr.mxu0 0.0
    %504 = vmatpush1.msra.mxu0 %v483
    %505 = vmatprep.subr.mxu0 0.0
    %506 = vmatpush1.msra.mxu0 %v482
    %507 = vmatprep.subr.mxu0 0.0
    %508 = vmatpush1.msra.mxu0 %v481
    %509 = vmatprep.subr.mxu0 0.0
    %510 = vmatpush1.msra.mxu0 %v480
    %511 = vmatprep.subr.mxu0 0.0
    %512 = vmatpush1.msra.mxu0 %v479
    %513 = vmatprep.subr.mxu0 0.0
    %514 = vmatpush1.msra.mxu0 %v478
    %515 = vmatprep.subr.mxu0 0.0
    %516 = vmatpush1.msra.mxu0 %v477
    %517 = vmatprep.subr.mxu0 0.0
    %518 = vmatpush1.msra.mxu0 %v476
    %519 = vmatprep.subr.mxu0 0.0
    %520 = vmatpush1.msra.mxu0 %v475
    %521 = vmatprep.subr.mxu0 0.0
    %522 = vmatpush1.msra.mxu0 %v474
    %523 = vmatprep.subr.mxu0 0.0
    %524 = vmatpush1.msra.mxu0 %v473
    %525 = vmatprep.subr.mxu0 0.0
    %526 = vmatpush1.msra.mxu0 %v472
    %527 = vmatprep.subr.mxu0 0.0
    %528 = vmatpush1.msra.mxu0 %v471
    %529 = vmatprep.subr.mxu0 0.0
    %530 = vmatpush1.msra.mxu0 %v470
    %531 = vmatprep.subr.mxu0 0.0
    %532 = vmatpush1.msra.mxu0 %v469
    %533 = vmatprep.subr.mxu0 0.0
    %534 = vmatpush2.msra.mxu0 %v500
    %535 = vmatprep.subr.mxu0 0.0
    %536 = vmatpush2.msra.mxu0 %v499
    %537 = vmatprep.subr.mxu0 0.0
    %538 = vmatpush2.msra.mxu0 %v498
    %539 = vmatprep.subr.mxu0 0.0
    %540 = vmatpush2.msra.mxu0 %v497
    %541 = vmatprep.subr.mxu0 0.0
    %542 = vmatpush2.msra.mxu0 %v496
    %543 = vmatprep.subr.mxu0 0.0
    %544 = vmatpush2.msra.mxu0 %v495
    %545 = vmatprep.subr.mxu0 0.0
    %546 = vmatpush2.msra.mxu0 %v494
    %547 = vmatprep.subr.mxu0 0.0
    %548 = vmatpush2.msra.mxu0 %v493
    %549 = vmatprep.subr.mxu0 0.0
    %550 = vmatpush2.msra.mxu0 %v492
    %551 = vmatprep.subr.mxu0 0.0
    %552 = vmatpush2.msra.mxu0 %v491
    %553 = vmatprep.subr.mxu0 0.0
    %554 = vmatpush2.msra.mxu0 %v490
    %555 = vmatprep.subr.mxu0 0.0
    %556 = vmatpush2.msra.mxu0 %v489
    %557 = vmatprep.subr.mxu0 0.0
    %558 = vmatpush2.msra.mxu0 %v488
    %559 = vmatprep.subr.mxu0 0.0
    %560 = vmatpush2.msra.mxu0 %v487
    %561 = vmatprep.subr.mxu0 0.0
    %562 = vmatpush2.msra.mxu0 %v486
    %563 = vmatprep.subr.mxu0 0.0
    %564 = vmatpush2.msra.mxu0 %v485
    %565 = vmatprep.mubr.f32.mxu0 %v251
    %566 = vmatmul.mubr.f32.gmra.mxu0 %v250
    %v567 = vpop.f32.mrf.mxu0
    %v568 = vadd.f32 0.0, %v567
    %v569 = vpop.f32.mrf.mxu0
    %570 = vdwg.mxu0
    %v571 = vadd.f32 %v465, %v568
    %s572 = scalar_lea.vmem %s3, 768
    %v573 = vld [vmem:[%s572] sm:$0xff]
    %v574 = vld [vmem:[%s572 + $0x8] sm:$0xff]
    %v575 = vld [vmem:[%s572 + $0x10] sm:$0xff]
    %v576 = vld [vmem:[%s572 + $0x18] sm:$0xff]
    %v577 = vld [vmem:[%s572 + $0x20] sm:$0xff]
    %v578 = vld [vmem:[%s572 + $0x28] sm:$0xff]
    %v579 = vld [vmem:[%s572 + $0x30] sm:$0xff]
    %v580 = vld [vmem:[%s572 + $0x38] sm:$0xff]
    %v581 = vld [vmem:[%s572 + $0x40] sm:$0xff]
    %v582 = vld [vmem:[%s572 + $0x48] sm:$0xff]
    %v583 = vld [vmem:[%s572 + $0x50] sm:$0xff]
    %v584 = vld [vmem:[%s572 + $0x58] sm:$0xff]
    %v585 = vld [vmem:[%s572 + $0x60] sm:$0xff]
    %v586 = vld [vmem:[%s572 + $0x68] sm:$0xff]
    %v587 = vld [vmem:[%s572 + $0x70] sm:$0xff]
    %v588 = vld [vmem:[%s572 + $0x78] sm:$0xff]
    %v589 = vld [vmem:[%s572 + $0x80] sm:$0xff]
    %v590 = vld [vmem:[%s572 + $0x88] sm:$0xff]
    %v591 = vld [vmem:[%s572 + $0x90] sm:$0xff]
    %v592 = vld [vmem:[%s572 + $0x98] sm:$0xff]
    %v593 = vld [vmem:[%s572 + $0xa0] sm:$0xff]
    %v594 = vld [vmem:[%s572 + $0xa8] sm:$0xff]
    %v595 = vld [vmem:[%s572 + $0xb0] sm:$0xff]
    %v596 = vld [vmem:[%s572 + $0xb8] sm:$0xff]
    %v597 = vld [vmem:[%s572 + $0xc0] sm:$0xff]
    %v598 = vld [vmem:[%s572 + $0xc8] sm:$0xff]
    %v599 = vld [vmem:[%s572 + $0xd0] sm:$0xff]
    %v600 = vld [vmem:[%s572 + $0xd8] sm:$0xff]
    %v601 = vld [vmem:[%s572 + $0xe0] sm:$0xff]
    %v602 = vld [vmem:[%s572 + $0xe8] sm:$0xff]
    %v603 = vld [vmem:[%s572 + $0xf0] sm:$0xff]
    %v604 = vld [vmem:[%s572 + $0xf8] sm:$0xff]
    %605 = vmatprep.subr.mxu0 0.0
    %606 = vmatpush1.msra.mxu0 %v588
    %607 = vmatprep.subr.mxu0 0.0
    %608 = vmatpush1.msra.mxu0 %v587
    %609 = vmatprep.subr.mxu0 0.0
    %610 = vmatpush1.msra.mxu0 %v586
    %611 = vmatprep.subr.mxu0 0.0
    %612 = vmatpush1.msra.mxu0 %v585
    %613 = vmatprep.subr.mxu0 0.0
    %614 = vmatpush1.msra.mxu0 %v584
    %615 = vmatprep.subr.mxu0 0.0
    %616 = vmatpush1.msra.mxu0 %v583
    %617 = vmatprep.subr.mxu0 0.0
    %618 = vmatpush1.msra.mxu0 %v582
    %619 = vmatprep.subr.mxu0 0.0
    %620 = vmatpush1.msra.mxu0 %v581
    %621 = vmatprep.subr.mxu0 0.0
    %622 = vmatpush1.msra.mxu0 %v580
    %623 = vmatprep.subr.mxu0 0.0
    %624 = vmatpush1.msra.mxu0 %v579
    %625 = vmatprep.subr.mxu0 0.0
    %626 = vmatpush1.msra.mxu0 %v578
    %627 = vmatprep.subr.mxu0 0.0
    %628 = vmatpush1.msra.mxu0 %v577
    %629 = vmatprep.subr.mxu0 0.0
    %630 = vmatpush1.msra.mxu0 %v576
    %631 = vmatprep.subr.mxu0 0.0
    %632 = vmatpush1.msra.mxu0 %v575
    %633 = vmatprep.subr.mxu0 0.0
    %634 = vmatpush1.msra.mxu0 %v574
    %635 = vmatprep.subr.mxu0 0.0
    %636 = vmatpush1.msra.mxu0 %v573
    %637 = vmatprep.subr.mxu0 0.0
    %638 = vmatpush2.msra.mxu0 %v604
    %639 = vmatprep.subr.mxu0 0.0
    %640 = vmatpush2.msra.mxu0 %v603
    %641 = vmatprep.subr.mxu0 0.0
    %642 = vmatpush2.msra.mxu0 %v602
    %643 = vmatprep.subr.mxu0 0.0
    %644 = vmatpush2.msra.mxu0 %v601
    %645 = vmatprep.subr.mxu0 0.0
    %646 = vmatpush2.msra.mxu0 %v600
    %647 = vmatprep.subr.mxu0 0.0
    %648 = vmatpush2.msra.mxu0 %v599
    %649 = vmatprep.subr.mxu0 0.0
    %650 = vmatpush2.msra.mxu0 %v598
    %651 = vmatprep.subr.mxu0 0.0
    %652 = vmatpush2.msra.mxu0 %v597
    %653 = vmatprep.subr.mxu0 0.0
    %654 = vmatpush2.msra.mxu0 %v596
    %655 = vmatprep.subr.mxu0 0.0
    %656 = vmatpush2.msra.mxu0 %v595
    %657 = vmatprep.subr.mxu0 0.0
    %658 = vmatpush2.msra.mxu0 %v594
    %659 = vmatprep.subr.mxu0 0.0
    %660 = vmatpush2.msra.mxu0 %v593
    %661 = vmatprep.subr.mxu0 0.0
    %662 = vmatpush2.msra.mxu0 %v592
    %663 = vmatprep.subr.mxu0 0.0
    %664 = vmatpush2.msra.mxu0 %v591
    %665 = vmatprep.subr.mxu0 0.0
    %666 = vmatpush2.msra.mxu0 %v590
    %667 = vmatprep.subr.mxu0 0.0
    %668 = vmatpush2.msra.mxu0 %v589
    %669 = vmatprep.mubr.f32.mxu0 %v253
    %670 = vmatmul.mubr.f32.gmra.mxu0 %v252
    %v671 = vpop.f32.mrf.mxu0
    %v672 = vadd.f32 0.0, %v671
    %v673 = vpop.f32.mrf.mxu0
    %674 = vdwg.mxu0
    %v675 = vadd.f32 %v571, %v672
    %s676 = scalar_lea.vmem %s3, 1024
    %v677 = vld [vmem:[%s676] sm:$0xff]
    %v678 = vld [vmem:[%s676 + $0x8] sm:$0xff]
    %v679 = vld [vmem:[%s676 + $0x10] sm:$0xff]
    %v680 = vld [vmem:[%s676 + $0x18] sm:$0xff]
    %v681 = vld [vmem:[%s676 + $0x20] sm:$0xff]
    %v682 = vld [vmem:[%s676 + $0x28] sm:$0xff]
    %v683 = vld [vmem:[%s676 + $0x30] sm:$0xff]
    %v684 = vld [vmem:[%s676 + $0x38] sm:$0xff]
    %v685 = vld [vmem:[%s676 + $0x40] sm:$0xff]
    %v686 = vld [vmem:[%s676 + $0x48] sm:$0xff]
    %v687 = vld [vmem:[%s676 + $0x50] sm:$0xff]
    %v688 = vld [vmem:[%s676 + $0x58] sm:$0xff]
    %v689 = vld [vmem:[%s676 + $0x60] sm:$0xff]
    %v690 = vld [vmem:[%s676 + $0x68] sm:$0xff]
    %v691 = vld [vmem:[%s676 + $0x70] sm:$0xff]
    %v692 = vld [vmem:[%s676 + $0x78] sm:$0xff]
    %v693 = vld [vmem:[%s676 + $0x80] sm:$0xff]
    %v694 = vld [vmem:[%s676 + $0x88] sm:$0xff]
    %v695 = vld [vmem:[%s676 + $0x90] sm:$0xff]
    %v696 = vld [vmem:[%s676 + $0x98] sm:$0xff]
    %v697 = vld [vmem:[%s676 + $0xa0] sm:$0xff]
    %v698 = vld [vmem:[%s676 + $0xa8] sm:$0xff]
    %v699 = vld [vmem:[%s676 + $0xb0] sm:$0xff]
    %v700 = vld [vmem:[%s676 + $0xb8] sm:$0xff]
    %v701 = vld [vmem:[%s676 + $0xc0] sm:$0xff]
    %v702 = vld [vmem:[%s676 + $0xc8] sm:$0xff]
    %v703 = vld [vmem:[%s676 + $0xd0] sm:$0xff]
    %v704 = vld [vmem:[%s676 + $0xd8] sm:$0xff]
    %v705 = vld [vmem:[%s676 + $0xe0] sm:$0xff]
    %v706 = vld [vmem:[%s676 + $0xe8] sm:$0xff]
    %v707 = vld [vmem:[%s676 + $0xf0] sm:$0xff]
    %v708 = vld [vmem:[%s676 + $0xf8] sm:$0xff]
    %709 = vmatprep.subr.mxu0 0.0
    %710 = vmatpush1.msra.mxu0 %v692
    %711 = vmatprep.subr.mxu0 0.0
    %712 = vmatpush1.msra.mxu0 %v691
    %713 = vmatprep.subr.mxu0 0.0
    %714 = vmatpush1.msra.mxu0 %v690
    %715 = vmatprep.subr.mxu0 0.0
    %716 = vmatpush1.msra.mxu0 %v689
    %717 = vmatprep.subr.mxu0 0.0
    %718 = vmatpush1.msra.mxu0 %v688
    %719 = vmatprep.subr.mxu0 0.0
    %720 = vmatpush1.msra.mxu0 %v687
    %721 = vmatprep.subr.mxu0 0.0
    %722 = vmatpush1.msra.mxu0 %v686
    %723 = vmatprep.subr.mxu0 0.0
    %724 = vmatpush1.msra.mxu0 %v685
    %725 = vmatprep.subr.mxu0 0.0
    %726 = vmatpush1.msra.mxu0 %v684
    %727 = vmatprep.subr.mxu0 0.0
    %728 = vmatpush1.msra.mxu0 %v683
    %729 = vmatprep.subr.mxu0 0.0
    %730 = vmatpush1.msra.mxu0 %v682
    %731 = vmatprep.subr.mxu0 0.0
    %732 = vmatpush1.msra.mxu0 %v681
    %733 = vmatprep.subr.mxu0 0.0
    %734 = vmatpush1.msra.mxu0 %v680
    %735 = vmatprep.subr.mxu0 0.0
    %736 = vmatpush1.msra.mxu0 %v679
    %737 = vmatprep.subr.mxu0 0.0
    %738 = vmatpush1.msra.mxu0 %v678
    %739 = vmatprep.subr.mxu0 0.0
    %740 = vmatpush1.msra.mxu0 %v677
    %741 = vmatprep.subr.mxu0 0.0
    %742 = vmatpush2.msra.mxu0 %v708
    %743 = vmatprep.subr.mxu0 0.0
    %744 = vmatpush2.msra.mxu0 %v707
    %745 = vmatprep.subr.mxu0 0.0
    %746 = vmatpush2.msra.mxu0 %v706
    %747 = vmatprep.subr.mxu0 0.0
    %748 = vmatpush2.msra.mxu0 %v705
    %749 = vmatprep.subr.mxu0 0.0
    %750 = vmatpush2.msra.mxu0 %v704
    %751 = vmatprep.subr.mxu0 0.0
    %752 = vmatpush2.msra.mxu0 %v703
    %753 = vmatprep.subr.mxu0 0.0
    %754 = vmatpush2.msra.mxu0 %v702
    %755 = vmatprep.subr.mxu0 0.0
    %756 = vmatpush2.msra.mxu0 %v701
    %757 = vmatprep.subr.mxu0 0.0
    %758 = vmatpush2.msra.mxu0 %v700
    %759 = vmatprep.subr.mxu0 0.0
    %760 = vmatpush2.msra.mxu0 %v699
    %761 = vmatprep.subr.mxu0 0.0
    %762 = vmatpush2.msra.mxu0 %v698
    %763 = vmatprep.subr.mxu0 0.0
    %764 = vmatpush2.msra.mxu0 %v697
    %765 = vmatprep.subr.mxu0 0.0
    %766 = vmatpush2.msra.mxu0 %v696
    %767 = vmatprep.subr.mxu0 0.0
    %768 = vmatpush2.msra.mxu0 %v695
    %769 = vmatprep.subr.mxu0 0.0
    %770 = vmatpush2.msra.mxu0 %v694
    %771 = vmatprep.subr.mxu0 0.0
    %772 = vmatpush2.msra.mxu0 %v693
    %773 = vmatprep.mubr.f32.mxu0 %v255
    %774 = vmatmul.mubr.f32.gmra.mxu0 %v254
    %v775 = vpop.f32.mrf.mxu0
    %v776 = vadd.f32 0.0, %v775
    %v777 = vpop.f32.mrf.mxu0
    %778 = vdwg.mxu0
    %v779 = vadd.f32 %v675, %v776
    %v781 = vlaneseq
    %v782 = vshrl.u32 %v781, 7
    %v783 = vsub.s32 0, %v782
    %v784 = vrot.slane %v262, %v783
    %v786 = vadd.f32 %v779, %v784
    %v787 = vmax.f32 %v786, 0.0
    %788 = vmatprep.subr.mxu0 0.0
    %789 = vmatpush1.msra.mxu0 %v311
    %790 = vmatprep.subr.mxu0 0.0
    %791 = vmatpush1.msra.mxu0 %v310
    %792 = vmatprep.subr.mxu0 0.0
    %793 = vmatpush1.msra.mxu0 %v309
    %794 = vmatprep.subr.mxu0 0.0
    %795 = vmatpush1.msra.mxu0 %v308
    %796 = vmatprep.subr.mxu0 0.0
    %797 = vmatpush1.msra.mxu0 %v307
    %798 = vmatprep.subr.mxu0 0.0
    %799 = vmatpush1.msra.mxu0 %v306
    %800 = vmatprep.subr.mxu0 0.0
    %801 = vmatpush1.msra.mxu0 %v305
    %802 = vmatprep.subr.mxu0 0.0
    %803 = vmatpush1.msra.mxu0 %v304
    %804 = vmatprep.subr.mxu0 0.0
    %805 = vmatpush1.msra.mxu0 %v303
    %806 = vmatprep.subr.mxu0 0.0
    %807 = vmatpush1.msra.mxu0 %v302
    %808 = vmatprep.subr.mxu0 0.0
    %809 = vmatpush1.msra.mxu0 %v301
    %810 = vmatprep.subr.mxu0 0.0
    %811 = vmatpush1.msra.mxu0 %v300
    %812 = vmatprep.subr.mxu0 0.0
    %813 = vmatpush1.msra.mxu0 %v299
    %814 = vmatprep.subr.mxu0 0.0
    %815 = vmatpush1.msra.mxu0 %v298
    %816 = vmatprep.subr.mxu0 0.0
    %817 = vmatpush1.msra.mxu0 %v297
    %818 = vmatprep.subr.mxu0 0.0
    %819 = vmatpush1.msra.mxu0 %v296
    %820 = vmatprep.subr.mxu0 0.0
    %821 = vmatpush2.msra.mxu0 %v327
    %822 = vmatprep.subr.mxu0 0.0
    %823 = vmatpush2.msra.mxu0 %v326
    %824 = vmatprep.subr.mxu0 0.0
    %825 = vmatpush2.msra.mxu0 %v325
    %826 = vmatprep.subr.mxu0 0.0
    %827 = vmatpush2.msra.mxu0 %v324
    %828 = vmatprep.subr.mxu0 0.0
    %829 = vmatpush2.msra.mxu0 %v323
    %830 = vmatprep.subr.mxu0 0.0
    %831 = vmatpush2.msra.mxu0 %v322
    %832 = vmatprep.subr.mxu0 0.0
    %833 = vmatpush2.msra.mxu0 %v321
    %834 = vmatprep.subr.mxu0 0.0
    %835 = vmatpush2.msra.mxu0 %v320
    %836 = vmatprep.subr.mxu0 0.0
    %837 = vmatpush2.msra.mxu0 %v319
    %838 = vmatprep.subr.mxu0 0.0
    %839 = vmatpush2.msra.mxu0 %v318
    %840 = vmatprep.subr.mxu0 0.0
    %841 = vmatpush2.msra.mxu0 %v317
    %842 = vmatprep.subr.mxu0 0.0
    %843 = vmatpush2.msra.mxu0 %v316
    %844 = vmatprep.subr.mxu0 0.0
    %845 = vmatpush2.msra.mxu0 %v315
    %846 = vmatprep.subr.mxu0 0.0
    %847 = vmatpush2.msra.mxu0 %v314
    %848 = vmatprep.subr.mxu0 0.0
    %849 = vmatpush2.msra.mxu0 %v313
    %850 = vmatprep.subr.mxu0 0.0
    %851 = vmatpush2.msra.mxu0 %v312
    %852 = vmatprep.mubr.f32.mxu0 %v255
    %853 = vmatmul.mubr.f32.gmra.mxu0 %v254
    %v854 = vpop.f32.mrf.mxu0
    %v855 = vadd.f32 0.0, %v854
    %v856 = vpop.f32.mrf.mxu0
    %857 = vdwg.mxu0
    %858 = vmatprep.subr.mxu0 0.0
    %859 = vmatpush1.msra.mxu0 %v278
    %860 = vmatprep.subr.mxu0 0.0
    %861 = vmatpush1.msra.mxu0 %v277
    %862 = vmatprep.subr.mxu0 0.0
    %863 = vmatpush1.msra.mxu0 %v276
    %864 = vmatprep.subr.mxu0 0.0
    %865 = vmatpush1.msra.mxu0 %v275
    %866 = vmatprep.subr.mxu0 0.0
    %867 = vmatpush1.msra.mxu0 %v274
    %868 = vmatprep.subr.mxu0 0.0
    %869 = vmatpush1.msra.mxu0 %v273
    %870 = vmatprep.subr.mxu0 0.0
    %871 = vmatpush1.msra.mxu0 %v272
    %872 = vmatprep.subr.mxu0 0.0
    %873 = vmatpush1.msra.mxu0 %v271
    %874 = vmatprep.subr.mxu0 0.0
    %875 = vmatpush1.msra.mxu0 %v270
    %876 = vmatprep.subr.mxu0 0.0
    %877 = vmatpush1.msra.mxu0 %v269
    %878 = vmatprep.subr.mxu0 0.0
    %879 = vmatpush1.msra.mxu0 %v268
    %880 = vmatprep.subr.mxu0 0.0
    %881 = vmatpush1.msra.mxu0 %v267
    %882 = vmatprep.subr.mxu0 0.0
    %883 = vmatpush1.msra.mxu0 %v266
    %884 = vmatprep.subr.mxu0 0.0
    %885 = vmatpush1.msra.mxu0 %v265
    %886 = vmatprep.subr.mxu0 0.0
    %887 = vmatpush1.msra.mxu0 %v264
    %888 = vmatprep.subr.mxu0 0.0
    %889 = vmatpush1.msra.mxu0 %v263
    %890 = vmatprep.subr.mxu0 0.0
    %891 = vmatpush2.msra.mxu0 %v294
    %892 = vmatprep.subr.mxu0 0.0
    %893 = vmatpush2.msra.mxu0 %v293
    %894 = vmatprep.subr.mxu0 0.0
    %895 = vmatpush2.msra.mxu0 %v292
    %896 = vmatprep.subr.mxu0 0.0
    %897 = vmatpush2.msra.mxu0 %v291
    %898 = vmatprep.subr.mxu0 0.0
    %899 = vmatpush2.msra.mxu0 %v290
    %900 = vmatprep.subr.mxu0 0.0
    %901 = vmatpush2.msra.mxu0 %v289
    %902 = vmatprep.subr.mxu0 0.0
    %903 = vmatpush2.msra.mxu0 %v288
    %904 = vmatprep.subr.mxu0 0.0
    %905 = vmatpush2.msra.mxu0 %v287
    %906 = vmatprep.subr.mxu0 0.0
    %907 = vmatpush2.msra.mxu0 %v286
    %908 = vmatprep.subr.mxu0 0.0
    %909 = vmatpush2.msra.mxu0 %v285
    %910 = vmatprep.subr.mxu0 0.0
    %911 = vmatpush2.msra.mxu0 %v284
    %912 = vmatprep.subr.mxu0 0.0
    %913 = vmatpush2.msra.mxu0 %v283
    %914 = vmatprep.subr.mxu0 0.0
    %915 = vmatpush2.msra.mxu0 %v282
    %916 = vmatprep.subr.mxu0 0.0
    %917 = vmatpush2.msra.mxu0 %v281
    %918 = vmatprep.subr.mxu0 0.0
    %919 = vmatpush2.msra.mxu0 %v280
    %920 = vmatprep.subr.mxu0 0.0
    %921 = vmatpush2.msra.mxu0 %v279
    %922 = vmatprep.mubr.f32.mxu0 %v253
    %923 = vmatmul.mubr.f32.gmra.mxu0 %v252
    %v924 = vpop.f32.mrf.mxu0
    %v925 = vadd.f32 %v855, %v924
    %v926 = vpop.f32.mrf.mxu0
    %927 = vdwg.mxu0
    %928 = vmatprep.subr.mxu0 0.0
    %929 = vmatpush1.msra.mxu0 %v484
    %930 = vmatprep.subr.mxu0 0.0
    %931 = vmatpush1.msra.mxu0 %v483
    %932 = vmatprep.subr.mxu0 0.0
    %933 = vmatpush1.msra.mxu0 %v482
    %934 = vmatprep.subr.mxu0 0.0
    %935 = vmatpush1.msra.mxu0 %v481
    %936 = vmatprep.subr.mxu0 0.0
    %937 = vmatpush1.msra.mxu0 %v480
    %938 = vmatprep.subr.mxu0 0.0
    %939 = vmatpush1.msra.mxu0 %v479
    %940 = vmatprep.subr.mxu0 0.0
    %941 = vmatpush1.msra.mxu0 %v478
    %942 = vmatprep.subr.mxu0 0.0
    %943 = vmatpush1.msra.mxu0 %v477
    %944 = vmatprep.subr.mxu0 0.0
    %945 = vmatpush1.msra.mxu0 %v476
    %946 = vmatprep.subr.mxu0 0.0
    %947 = vmatpush1.msra.mxu0 %v475
    %948 = vmatprep.subr.mxu0 0.0
    %949 = vmatpush1.msra.mxu0 %v474
    %950 = vmatprep.subr.mxu0 0.0
    %951 = vmatpush1.msra.mxu0 %v473
    %952 = vmatprep.subr.mxu0 0.0
    %953 = vmatpush1.msra.mxu0 %v472
    %954 = vmatprep.subr.mxu0 0.0
    %955 = vmatpush1.msra.mxu0 %v471
    %956 = vmatprep.subr.mxu0 0.0
    %957 = vmatpush1.msra.mxu0 %v470
    %958 = vmatprep.subr.mxu0 0.0
    %959 = vmatpush1.msra.mxu0 %v469
    %960 = vmatprep.subr.mxu0 0.0
    %961 = vmatpush2.msra.mxu0 %v500
    %962 = vmatprep.subr.mxu0 0.0
    %963 = vmatpush2.msra.mxu0 %v499
    %964 = vmatprep.subr.mxu0 0.0
    %965 = vmatpush2.msra.mxu0 %v498
    %966 = vmatprep.subr.mxu0 0.0
    %967 = vmatpush2.msra.mxu0 %v497
    %968 = vmatprep.subr.mxu0 0.0
    %969 = vmatpush2.msra.mxu0 %v496
    %970 = vmatprep.subr.mxu0 0.0
    %971 = vmatpush2.msra.mxu0 %v495
    %972 = vmatprep.subr.mxu0 0.0
    %973 = vmatpush2.msra.mxu0 %v494
    %974 = vmatprep.subr.mxu0 0.0
    %975 = vmatpush2.msra.mxu0 %v493
    %976 = vmatprep.subr.mxu0 0.0
    %977 = vmatpush2.msra.mxu0 %v492
    %978 = vmatprep.subr.mxu0 0.0
    %979 = vmatpush2.msra.mxu0 %v491
    %980 = vmatprep.subr.mxu0 0.0
    %981 = vmatpush2.msra.mxu0 %v490
    %982 = vmatprep.subr.mxu0 0.0
    %983 = vmatpush2.msra.mxu0 %v489
    %984 = vmatprep.subr.mxu0 0.0
    %985 = vmatpush2.msra.mxu0 %v488
    %986 = vmatprep.subr.mxu0 0.0
    %987 = vmatpush2.msra.mxu0 %v487
    %988 = vmatprep.subr.mxu0 0.0
    %989 = vmatpush2.msra.mxu0 %v486
    %990 = vmatprep.subr.mxu0 0.0
    %991 = vmatpush2.msra.mxu0 %v485
    %992 = vmatprep.mubr.f32.mxu0 %v257
    %993 = vmatmul.mubr.f32.gmra.mxu0 %v256
    %v994 = vpop.f32.mrf.mxu0
    %v995 = vadd.f32 0.0, %v994
    %v996 = vpop.f32.mrf.mxu0
    %997 = vdwg.mxu0
    %v998 = vadd.f32 %v925, %v995
    %999 = vmatprep.subr.mxu0 0.0
    %1000 = vmatpush1.msra.mxu0 %v588
    %1001 = vmatprep.subr.mxu0 0.0
    %1002 = vmatpush1.msra.mxu0 %v587
    %1003 = vmatprep.subr.mxu0 0.0
    %1004 = vmatpush1.msra.mxu0 %v586
    %1005 = vmatprep.subr.mxu0 0.0
    %1006 = vmatpush1.msra.mxu0 %v585
    %1007 = vmatprep.subr.mxu0 0.0
    %1008 = vmatpush1.msra.mxu0 %v584
    %1009 = vmatprep.subr.mxu0 0.0
    %1010 = vmatpush1.msra.mxu0 %v583
    %1011 = vmatprep.subr.mxu0 0.0
    %1012 = vmatpush1.msra.mxu0 %v582
    %1013 = vmatprep.subr.mxu0 0.0
    %1014 = vmatpush1.msra.mxu0 %v581
    %1015 = vmatprep.subr.mxu0 0.0
    %1016 = vmatpush1.msra.mxu0 %v580
    %1017 = vmatprep.subr.mxu0 0.0
    %1018 = vmatpush1.msra.mxu0 %v579
    %1019 = vmatprep.subr.mxu0 0.0
    %1020 = vmatpush1.msra.mxu0 %v578
    %1021 = vmatprep.subr.mxu0 0.0
    %1022 = vmatpush1.msra.mxu0 %v577
    %1023 = vmatprep.subr.mxu0 0.0
    %1024 = vmatpush1.msra.mxu0 %v576
    %1025 = vmatprep.subr.mxu0 0.0
    %1026 = vmatpush1.msra.mxu0 %v575
    %1027 = vmatprep.subr.mxu0 0.0
    %1028 = vmatpush1.msra.mxu0 %v574
    %1029 = vmatprep.subr.mxu0 0.0
    %1030 = vmatpush1.msra.mxu0 %v573
    %1031 = vmatprep.subr.mxu0 0.0
    %1032 = vmatpush2.msra.mxu0 %v604
    %1033 = vmatprep.subr.mxu0 0.0
    %1034 = vmatpush2.msra.mxu0 %v603
    %1035 = vmatprep.subr.mxu0 0.0
    %1036 = vmatpush2.msra.mxu0 %v602
    %1037 = vmatprep.subr.mxu0 0.0
    %1038 = vmatpush2.msra.mxu0 %v601
    %1039 = vmatprep.subr.mxu0 0.0
    %1040 = vmatpush2.msra.mxu0 %v600
    %1041 = vmatprep.subr.mxu0 0.0
    %1042 = vmatpush2.msra.mxu0 %v599
    %1043 = vmatprep.subr.mxu0 0.0
    %1044 = vmatpush2.msra.mxu0 %v598
    %1045 = vmatprep.subr.mxu0 0.0
    %1046 = vmatpush2.msra.mxu0 %v597
    %1047 = vmatprep.subr.mxu0 0.0
    %1048 = vmatpush2.msra.mxu0 %v596
    %1049 = vmatprep.subr.mxu0 0.0
    %1050 = vmatpush2.msra.mxu0 %v595
    %1051 = vmatprep.subr.mxu0 0.0
    %1052 = vmatpush2.msra.mxu0 %v594
    %1053 = vmatprep.subr.mxu0 0.0
    %1054 = vmatpush2.msra.mxu0 %v593
    %1055 = vmatprep.subr.mxu0 0.0
    %1056 = vmatpush2.msra.mxu0 %v592
    %1057 = vmatprep.subr.mxu0 0.0
    %1058 = vmatpush2.msra.mxu0 %v591
    %1059 = vmatprep.subr.mxu0 0.0
    %1060 = vmatpush2.msra.mxu0 %v590
    %1061 = vmatprep.subr.mxu0 0.0
    %1062 = vmatpush2.msra.mxu0 %v589
    %1063 = vmatprep.mubr.f32.mxu0 %v259
    %1064 = vmatmul.mubr.f32.gmra.mxu0 %v258
    %v1065 = vpop.f32.mrf.mxu0
    %v1066 = vadd.f32 0.0, %v1065
    %v1067 = vpop.f32.mrf.mxu0
    %1068 = vdwg.mxu0
    %v1069 = vadd.f32 %v998, %v1066
    %1070 = vmatprep.subr.mxu0 0.0
    %1071 = vmatpush1.msra.mxu0 %v692
    %1072 = vmatprep.subr.mxu0 0.0
    %1073 = vmatpush1.msra.mxu0 %v691
    %1074 = vmatprep.subr.mxu0 0.0
    %1075 = vmatpush1.msra.mxu0 %v690
    %1076 = vmatprep.subr.mxu0 0.0
    %1077 = vmatpush1.msra.mxu0 %v689
    %1078 = vmatprep.subr.mxu0 0.0
    %1079 = vmatpush1.msra.mxu0 %v688
    %1080 = vmatprep.subr.mxu0 0.0
    %1081 = vmatpush1.msra.mxu0 %v687
    %1082 = vmatprep.subr.mxu0 0.0
    %1083 = vmatpush1.msra.mxu0 %v686
    %1084 = vmatprep.subr.mxu0 0.0
    %1085 = vmatpush1.msra.mxu0 %v685
    %1086 = vmatprep.subr.mxu0 0.0
    %1087 = vmatpush1.msra.mxu0 %v684
    %1088 = vmatprep.subr.mxu0 0.0
    %1089 = vmatpush1.msra.mxu0 %v683
    %1090 = vmatprep.subr.mxu0 0.0
    %1091 = vmatpush1.msra.mxu0 %v682
    %1092 = vmatprep.subr.mxu0 0.0
    %1093 = vmatpush1.msra.mxu0 %v681
    %1094 = vmatprep.subr.mxu0 0.0
    %1095 = vmatpush1.msra.mxu0 %v680
    %1096 = vmatprep.subr.mxu0 0.0
    %1097 = vmatpush1.msra.mxu0 %v679
    %1098 = vmatprep.subr.mxu0 0.0
    %1099 = vmatpush1.msra.mxu0 %v678
    %1100 = vmatprep.subr.mxu0 0.0
    %1101 = vmatpush1.msra.mxu0 %v677
    %1102 = vmatprep.subr.mxu0 0.0
    %1103 = vmatpush2.msra.mxu0 %v708
    %1104 = vmatprep.subr.mxu0 0.0
    %1105 = vmatpush2.msra.mxu0 %v707
    %1106 = vmatprep.subr.mxu0 0.0
    %1107 = vmatpush2.msra.mxu0 %v706
    %1108 = vmatprep.subr.mxu0 0.0
    %1109 = vmatpush2.msra.mxu0 %v705
    %1110 = vmatprep.subr.mxu0 0.0
    %1111 = vmatpush2.msra.mxu0 %v704
    %1112 = vmatprep.subr.mxu0 0.0
    %1113 = vmatpush2.msra.mxu0 %v703
    %1114 = vmatprep.subr.mxu0 0.0
    %1115 = vmatpush2.msra.mxu0 %v702
    %1116 = vmatprep.subr.mxu0 0.0
    %1117 = vmatpush2.msra.mxu0 %v701
    %1118 = vmatprep.subr.mxu0 0.0
    %1119 = vmatpush2.msra.mxu0 %v700
    %1120 = vmatprep.subr.mxu0 0.0
    %1121 = vmatpush2.msra.mxu0 %v699
    %1122 = vmatprep.subr.mxu0 0.0
    %1123 = vmatpush2.msra.mxu0 %v698
    %1124 = vmatprep.subr.mxu0 0.0
    %1125 = vmatpush2.msra.mxu0 %v697
    %1126 = vmatprep.subr.mxu0 0.0
    %1127 = vmatpush2.msra.mxu0 %v696
    %1128 = vmatprep.subr.mxu0 0.0
    %1129 = vmatpush2.msra.mxu0 %v695
    %1130 = vmatprep.subr.mxu0 0.0
    %1131 = vmatpush2.msra.mxu0 %v694
    %1132 = vmatprep.subr.mxu0 0.0
    %1133 = vmatpush2.msra.mxu0 %v693
    %1134 = vmatprep.mubr.f32.mxu0 %v261
    %1135 = vmatmul.mubr.f32.gmra.mxu0 %v260
    %v1136 = vpop.f32.mrf.mxu0
    %v1137 = vadd.f32 0.0, %v1136
    %v1138 = vpop.f32.mrf.mxu0
    %1139 = vdwg.mxu0
    %v1140 = vadd.f32 %v1069, %v1137
    %v1141 = vadd.f32 %v1140, %v784
    %v1142 = vmax.f32 %v1141, 0.0
    %v1143 = vld [vmem:[%s5] sm:$0xff]
    %v1144 = vld [vmem:[%s5 + $0x8] sm:$0xff]
    %v1145 = vld [vmem:[%s5 + $0x10] sm:$0xff]
    %v1146 = vld [vmem:[%s5 + $0x18] sm:$0xff]
    %v1147 = vld [vmem:[%s5 + $0x20] sm:$0xff]
    %v1148 = vld [vmem:[%s5 + $0x28] sm:$0xff]
    %v1149 = vld [vmem:[%s5 + $0x30] sm:$0xff]
    %v1150 = vld [vmem:[%s5 + $0x38] sm:$0xff]
    %v1151 = vld [vmem:[%s5 + $0x40] sm:$0xff]
    %v1152 = vld [vmem:[%s5 + $0x48] sm:$0xff]
    %v1153 = vld [vmem:[%s5 + $0x50] sm:$0xff]
    %v1154 = vld [vmem:[%s5 + $0x58] sm:$0xff]
    %v1155 = vld [vmem:[%s5 + $0x60] sm:$0xff]
    %v1156 = vld [vmem:[%s5 + $0x68] sm:$0xff]
    %v1157 = vld [vmem:[%s5 + $0x70] sm:$0xff]
    %v1158 = vld [vmem:[%s5 + $0x78] sm:$0xff]
    %v1159 = vld [vmem:[%s5 + $0x80] sm:$0xff]
    %v1160 = vld [vmem:[%s5 + $0x88] sm:$0xff]
    %v1161 = vld [vmem:[%s5 + $0x90] sm:$0xff]
    %v1162 = vld [vmem:[%s5 + $0x98] sm:$0xff]
    %v1163 = vld [vmem:[%s5 + $0xa0] sm:$0xff]
    %v1164 = vld [vmem:[%s5 + $0xa8] sm:$0xff]
    %v1165 = vld [vmem:[%s5 + $0xb0] sm:$0xff]
    %v1166 = vld [vmem:[%s5 + $0xb8] sm:$0xff]
    %v1167 = vld [vmem:[%s5 + $0xc0] sm:$0xff]
    %v1168 = vld [vmem:[%s5 + $0xc8] sm:$0xff]
    %v1169 = vld [vmem:[%s5 + $0xd0] sm:$0xff]
    %v1170 = vld [vmem:[%s5 + $0xd8] sm:$0xff]
    %v1171 = vld [vmem:[%s5 + $0xe0] sm:$0xff]
    %v1172 = vld [vmem:[%s5 + $0xe8] sm:$0xff]
    %v1173 = vld [vmem:[%s5 + $0xf0] sm:$0xff]
    %v1174 = vld [vmem:[%s5 + $0xf8] sm:$0xff]
    %v1175 = vld [vmem:[%s6] sm:$0x1]
    %v1177 = vlaneseq
    %v1178 = vshrl.u32 %v1177, 7
    %v1179 = vsub.s32 0, %v1178
    %v1180 = vrot.slane %v1175, %v1179
    %1182 = vmatprep.subr.mxu0 0.0
    %1183 = vmatpush1.msra.mxu0 %v1158
    %1184 = vmatprep.subr.mxu0 0.0
    %1185 = vmatpush1.msra.mxu0 %v1157
    %1186 = vmatprep.subr.mxu0 0.0
    %1187 = vmatpush1.msra.mxu0 %v1156
    %1188 = vmatprep.subr.mxu0 0.0
    %1189 = vmatpush1.msra.mxu0 %v1155
    %1190 = vmatprep.subr.mxu0 0.0
    %1191 = vmatpush1.msra.mxu0 %v1154
    %1192 = vmatprep.subr.mxu0 0.0
    %1193 = vmatpush1.msra.mxu0 %v1153
    %1194 = vmatprep.subr.mxu0 0.0
    %1195 = vmatpush1.msra.mxu0 %v1152
    %1196 = vmatprep.subr.mxu0 0.0
    %1197 = vmatpush1.msra.mxu0 %v1151
    %1198 = vmatprep.subr.mxu0 0.0
    %1199 = vmatpush1.msra.mxu0 %v1150
    %1200 = vmatprep.subr.mxu0 0.0
    %1201 = vmatpush1.msra.mxu0 %v1149
    %1202 = vmatprep.subr.mxu0 0.0
    %1203 = vmatpush1.msra.mxu0 %v1148
    %1204 = vmatprep.subr.mxu0 0.0
    %1205 = vmatpush1.msra.mxu0 %v1147
    %1206 = vmatprep.subr.mxu0 0.0
    %1207 = vmatpush1.msra.mxu0 %v1146
    %1208 = vmatprep.subr.mxu0 0.0
    %1209 = vmatpush1.msra.mxu0 %v1145
    %1210 = vmatprep.subr.mxu0 0.0
    %1211 = vmatpush1.msra.mxu0 %v1144
    %1212 = vmatprep.subr.mxu0 0.0
    %1213 = vmatpush1.msra.mxu0 %v1143
    %1214 = vmatprep.subr.mxu0 0.0
    %1215 = vmatpush2.msra.mxu0 %v1174
    %1216 = vmatprep.subr.mxu0 0.0
    %1217 = vmatpush2.msra.mxu0 %v1173
    %1218 = vmatprep.subr.mxu0 0.0
    %1219 = vmatpush2.msra.mxu0 %v1172
    %1220 = vmatprep.subr.mxu0 0.0
    %1221 = vmatpush2.msra.mxu0 %v1171
    %1222 = vmatprep.subr.mxu0 0.0
    %1223 = vmatpush2.msra.mxu0 %v1170
    %1224 = vmatprep.subr.mxu0 0.0
    %1225 = vmatpush2.msra.mxu0 %v1169
    %1226 = vmatprep.subr.mxu0 0.0
    %1227 = vmatpush2.msra.mxu0 %v1168
    %1228 = vmatprep.subr.mxu0 0.0
    %1229 = vmatpush2.msra.mxu0 %v1167
    %1230 = vmatprep.subr.mxu0 0.0
    %1231 = vmatpush2.msra.mxu0 %v1166
    %1232 = vmatprep.subr.mxu0 0.0
    %1233 = vmatpush2.msra.mxu0 %v1165
    %1234 = vmatprep.subr.mxu0 0.0
    %1235 = vmatpush2.msra.mxu0 %v1164
    %1236 = vmatprep.subr.mxu0 0.0
    %1237 = vmatpush2.msra.mxu0 %v1163
    %1238 = vmatprep.subr.mxu0 0.0
    %1239 = vmatpush2.msra.mxu0 %v1162
    %1240 = vmatprep.subr.mxu0 0.0
    %1241 = vmatpush2.msra.mxu0 %v1161
    %1242 = vmatprep.subr.mxu0 0.0
    %1243 = vmatpush2.msra.mxu0 %v1160
    %1244 = vmatprep.subr.mxu0 0.0
    %1245 = vmatpush2.msra.mxu0 %v1159
    %1246 = vmatprep.mubr.f32.mxu0 %v1142
    %1247 = vmatmul.mubr.f32.gmra.mxu0 %v787
    %v1248 = vpop.f32.mrf.mxu0
    %v1249 = vadd.f32 %v1180, %v1248
    %v1250 = vpop.f32.mrf.mxu0
    %1251 = vdwg.mxu0
    %1252 = vst [vmem:[%s7] sm:$0xff] %v1249
    // Predicated region
    $region34: #{convnet_forward.1} parent=1 // pred_check
      _
    $region35: #{convnet_forward.1} parent=1 // pred_check_branch
      %1254 = sbr.rel (0) target = $region37
    $region36: #{convnet_forward.1} parent=1 // pred_region
      _
    $region37: #{convnet_forward.1} parent=1 // pred_fallthru
      _
    // Predicated region
    $region38: #{convnet_forward.1} parent=1 // pred_check
      _
    $region39: #{convnet_forward.1} parent=1 // pred_check_branch
      %1256 = sbr.rel (0) target = $region41
    $region40: #{convnet_forward.1} parent=1 // pred_region
      _
    $region41: #{convnet_forward.1} parent=1 // pred_fallthru
      _
    %1257 = vsyncpa [#allocation3], 1

</llo_original>
